<compile_context>
chip_gen: v7x
topology: tpu7x:2x2x1
jax: 0.10.0
libtpu: 0.0.40
codegen_flags: <defaults>
</compile_context>

<pallas_src>
import functools

import jax
import jax.numpy as jnp
from jax import lax
from jax.experimental import pallas as pl
from jax.experimental.pallas import tpu as pltpu

DILATIONS = (1, 2, 3, 4)  # the four conv2d_list branches (padding = dilation)
KSIZE = 3                 # 3x3 kernels


def aspp_kernel(x_ref, wt_ref, be_ref, out_ref, xcol_ref, *,
                dy_groups, C, W, HW, NB):
    """One grid step = NB batch elements.

    x_ref    : (NB, C, Lp)    row-padded, flattened input (f32)
    wt_ref   : (C, KD)        folded tap weights (1x1 projection pre-applied)
    be_ref   : (C, 1)         folded bias
    out_ref  : (NB, C, H*W)   flattened-NCHW output block (H*W on lanes)
    xcol_ref : (KD, NB*H*W)   im2col scratch, KD = 36*C (no padding rows)

    dy_groups: static tuple of (base_start, ((row_offset, dx), ...)) — one entry
               per distinct vertical tap offset dy; all dx-shifted taps of that
               row are derived from a single base window load.
    """
    cdtype = xcol_ref.dtype

    # Per-lane column index (x coordinate).  The 8 distinct dx masks are built
    # once and reused (JAX does not CSE these reliably).
    lane = lax.broadcasted_iota(jnp.int32, (C, HW), 1)
    col = (lane & (W - 1)) if (W & (W - 1)) == 0 else (lane % W)
    keep = {}
    for _start, taps in dy_groups:
        for _row, dx in taps:
            if dx != 0 and dx not in keep:
                keep[dx] = (col < (W - dx)) if dx > 0 else (col >= -dx)

    # Build the im2col buffer.  Every logical row of xcol_ref is written every
    # step, so no zero-fill is needed (perf-review item 1).
    for b in range(NB):
        c0 = b * HW
        for start, taps in dy_groups:
            # One shared (C, H*W) base window per distinct dy (the dx == 0 tap).
            base = x_ref[b, :, start:start + HW]
            for row, dx in taps:
                if dx == 0:
                    patch = base
                else:
                    # Shift the base window by dx pixels along the flattened
                    # row-major axis; wrapped / out-of-row lanes are zeroed by
                    # the hoisted column mask.  (pltpu.roll would move this onto
                    # the XLU slot; jnp.roll keeps np.roll semantics explicit.)
                    patch = jnp.where(keep[dx], jnp.roll(base, -dx, axis=1), 0.0)
                xcol_ref[row:row + C, c0:c0 + HW] = patch.astype(cdtype)

    # One MXU matmul: (C, KD) @ (KD, NB*H*W), f32 accumulation.
    acc = jnp.dot(wt_ref[...], xcol_ref[...],
                  preferred_element_type=jnp.float32)
    for b in range(NB):
        out_ref[b] = (acc[:, b * HW:(b + 1) * HW] + be_ref[...]).astype(out_ref.dtype)


def _pick_nb(N, C, HW, KD, itemsize, budget_bytes):
    """Largest NB dividing N that keeps >= 2 grid steps (v7x megacore) and the
    im2col scratch under `budget_bytes`."""
    best = 1
    min_steps = 2 if N >= 2 else 1
    for nb in range(1, N + 1):
        if N % nb:
            continue
        if N // nb < min_steps:
            continue
        if KD * nb * HW * itemsize > budget_bytes:
            continue
        best = nb
    return best


def aspp_forward(x_nchw, branches, w1, b1, *, compute_dtype=jnp.float32):
    """branches: list of 4 (w_hwio (3,3,C,C), b (1,C)); w1: (4C,C); b1: (1,C).

    compute_dtype: dtype of the folded weights + im2col scratch.  Use
    jnp.bfloat16 on v6e/v7x for realistic channel counts (halves scratch/store
    traffic, bf16-native MXU); f32 default keeps the small-size check tight.
    """
    x = x_nchw.astype(jnp.float32)
    N, C, H, W = x.shape
    maxd = max(DILATIONS)
    HW = H * W
    flat_len = (H + 2 * maxd) * W
    Lp = -(-flat_len // 128) * 128          # lane axis rounded up to 128

    # Stay in NCHW: zero-pad rows (vertical conv padding), flatten (H, W) -> H*W
    # onto the lane axis.  Horizontal padding is handled by masks in the kernel.
    x_rows = jnp.pad(x, ((0, 0), (0, 0), (maxd, maxd), (0, 0)))
    x_flat = x_rows.reshape(N, C, flat_len)
    if Lp != flat_len:
        x_flat = jnp.pad(x_flat, ((0, 0), (0, 0), (0, Lp - flat_len)))

    # Fold the 1x1 projection into every dilated-conv tap (host side, tiny),
    # grouping taps by vertical offset dy so the kernel can share one base
    # window load per dy and derive the +-dx taps with a lane shift + mask.
    blocks = []
    groups = {}          # dy -> list of (row_offset_in_xcol, dx)
    t = 0
    for bidx, ((w, _bb), d) in enumerate(zip(branches, DILATIONS)):
        wp_slice = w1[bidx * C:(bidx + 1) * C, :]              # (C, C)
        for ky in range(KSIZE):
            for kx in range(KSIZE):
                blocks.append(jnp.dot(w[ky, kx], wp_slice))    # (Cin, Cout)
                dy, dx = (ky - 1) * d, (kx - 1) * d
                groups.setdefault(dy, []).append((t * C, dx))
                t += 1
    KD = t * C                                                 # 36*C, no pad rows
    wt = jnp.concatenate(blocks, axis=0).T.astype(compute_dtype)   # (C, KD)

    b_eff = b1
    for bidx, ((_w, bb), _d) in enumerate(zip(branches, DILATIONS)):
        b_eff = b_eff + jnp.dot(bb, w1[bidx * C:(bidx + 1) * C, :])
    be = b_eff.T.astype(jnp.float32)                           # (C, 1)

    dy_groups = tuple(sorted(
        ((dy + maxd) * W, tuple(taps)) for dy, taps in groups.items()))

    itemsize = jnp.dtype(compute_dtype).itemsize
    NB = _pick_nb(N, C, HW, KD, itemsize, budget_bytes=4 << 20)
    G = N // NB

    kern = functools.partial(aspp_kernel, dy_groups=dy_groups,
                             C=C, W=W, HW=HW, NB=NB)

    # Explicit VMEM budget: scratch + double-buffered I/O blocks + weights.
    vmem_bytes = (KD * NB * HW * itemsize           # im2col scratch
                  + 2 * NB * C * Lp * 4             # input block, double-buffered
                  + 2 * NB * C * HW * 4             # output block, double-buffered
                  + C * (KD + 1) * 4)               # wt + be
    vmem_limit = int(min(100 * 2 ** 20, max(32 * 2 ** 20, 2 * vmem_bytes)))

    out_flat = pl.pallas_call(
        kern,
        out_shape=jax.ShapeDtypeStruct((N, C, HW), jnp.float32),
        grid=(G,),
        in_specs=[
            pl.BlockSpec((NB, C, Lp), lambda g: (g, 0, 0)),
            pl.BlockSpec((C, KD), lambda g: (0, 0)),
            pl.BlockSpec((C, 1), lambda g: (0, 0)),
        ],
        out_specs=pl.BlockSpec((NB, C, HW), lambda g: (g, 0, 0)),
        scratch_shapes=[pltpu.VMEM((KD, NB * HW), compute_dtype)],
        compiler_params=pltpu.CompilerParams(
            dimension_semantics=("parallel",),
            vmem_limit_bytes=vmem_limit),
    )(x_flat, wt, be)

    # (N, C, H*W) is flattened NCHW -> a free reshape, no transpose needed.
    return out_flat.reshape(N, C, H, W)


def aspp_reference(x_nchw, branches, w1, b1):
    """Pure-JAX reference (mirrors the PyTorch forward)."""
    x = jnp.transpose(x_nchw, (0, 2, 3, 1)).astype(jnp.float32)
    outs = []
    for (w, b), d in zip(branches, DILATIONS):
        y = lax.conv_general_dilated(
            x, w, window_strides=(1, 1), padding=[(d, d), (d, d)],
            rhs_dilation=(d, d),
            dimension_numbers=("NHWC", "HWIO", "NHWC"))
        outs.append(y + b.reshape(1, 1, 1, -1))
    cat = jnp.concatenate(outs, axis=-1)                       # channel concat
    out = jnp.einsum("nhwc,cd->nhwd", cat, w1) + b1.reshape(1, 1, 1, -1)
    return jnp.transpose(out, (0, 3, 1, 2))


if __name__ == "__main__":
    def make_params(key, C):
        keys = jax.random.split(key, 10)
        branches = []
        ki = 0
        for _ in DILATIONS:
            w = 0.01 * jax.random.normal(keys[ki], (KSIZE, KSIZE, C, C), jnp.float32)
            b = 0.01 * jax.random.normal(keys[ki + 1], (1, C), jnp.float32)
            branches.append((w, b))
            ki += 2
        w1 = 0.01 * jax.random.normal(keys[ki], (4 * C, C), jnp.float32)
        b1 = 0.01 * jax.random.normal(keys[ki + 1], (1, C), jnp.float32)
        return branches, w1, b1

    N, C, H, W = 2, 4, 16, 16  # input_nc = 4
    key = jax.random.PRNGKey(0)
    kx_key, kp_key, kx2_key = jax.random.split(key, 3)

    x = jax.random.normal(kx_key, (N, C, H, W), jnp.float32)
    branches, w1, b1 = make_params(kp_key, C)

    out = aspp_forward(x, branches, w1, b1)
    jax.block_until_ready(out)
    ref = aspp_reference(x, branches, w1, b1)
    assert out.shape == (N, C, H, W)
    assert jnp.allclose(out, ref, atol=1e-5, rtol=1e-4), "mismatch vs reference (N=2)"

    # Also exercise the multi-image-per-step path (N=4 -> NB=2, grid=(2,)).
    x2 = jax.random.normal(kx2_key, (4, C, H, W), jnp.float32)
    out2 = aspp_forward(x2, branches, w1, b1)
    jax.block_until_ready(out2)
    ref2 = aspp_reference(x2, branches, w1, b1)
    assert jnp.allclose(out2, ref2, atol=1e-5, rtol=1e-4), "mismatch vs reference (N=4)"

    print("KERNEL_OK")
</pallas_src>

<mosaic_0001>
module attributes {stable_mosaic.version = 11 : i64} {
  func.func @aspp_kernel(%arg0: i32, %arg1: memref<1x4x384xf32, #tpu.memory_space<vmem>>, %arg2: memref<4x144xf32, #tpu.memory_space<vmem>>, %arg3: memref<4x1xf32, #tpu.memory_space<vmem>>, %arg4: memref<1x4x256xf32, #tpu.memory_space<vmem>>, %arg5: memref<144x256xf32, #tpu.memory_space<vmem>>) attributes {dimension_semantics = [#tpu.dimension_semantics<parallel>], iteration_bounds = array<i64: 2>, scalar_prefetch = 0 : i64, scratch_operands = 1 : i64, tpu.core_type = #tpu.core_type<tc>, window_params = [{transform_indices = @transform_0, window_bounds = array<i64: 1, 4, 384>}, {pipeline_mode = #tpu.pipeline_mode<synchronous>, transform_indices = @transform_1, window_bounds = array<i64: 4, 144>}, {pipeline_mode = #tpu.pipeline_mode<synchronous>, transform_indices = @transform_2, window_bounds = array<i64: 4, 1>}, {transform_indices = @transform_3, window_bounds = array<i64: 1, 4, 256>}]} {
    %0 = tpu.iota {dimensions = array<i32: 1>} : vector<4x256xi32>
    %c15_i32 = arith.constant 15 : i32
    %1 = vector.broadcast %c15_i32 : i32 to vector<4x256xi32>
    %2 = arith.andi %0, %1 : vector<4x256xi32>
    %c4_i32 = arith.constant 4 : i32
    %3 = vector.broadcast %c4_i32 : i32 to vector<4x256xi32>
    %4 = arith.cmpi sge, %2, %3 : vector<4x256xi32>
    %c12_i32 = arith.constant 12 : i32
    %5 = vector.broadcast %c12_i32 : i32 to vector<4x256xi32>
    %6 = arith.cmpi slt, %2, %5 : vector<4x256xi32>
    %c3_i32 = arith.constant 3 : i32
    %7 = vector.broadcast %c3_i32 : i32 to vector<4x256xi32>
    %8 = arith.cmpi sge, %2, %7 : vector<4x256xi32>
    %c13_i32 = arith.constant 13 : i32
    %9 = vector.broadcast %c13_i32 : i32 to vector<4x256xi32>
    %10 = arith.cmpi slt, %2, %9 : vector<4x256xi32>
    %c2_i32 = arith.constant 2 : i32
    %11 = vector.broadcast %c2_i32 : i32 to vector<4x256xi32>
    %12 = arith.cmpi sge, %2, %11 : vector<4x256xi32>
    %c14_i32 = arith.constant 14 : i32
    %13 = vector.broadcast %c14_i32 : i32 to vector<4x256xi32>
    %14 = arith.cmpi slt, %2, %13 : vector<4x256xi32>
    %c1_i32 = arith.constant 1 : i32
    %15 = vector.broadcast %c1_i32 : i32 to vector<4x256xi32>
    %16 = arith.cmpi sge, %2, %15 : vector<4x256xi32>
    %c15_i32_0 = arith.constant 15 : i32
    %17 = vector.broadcast %c15_i32_0 : i32 to vector<4x256xi32>
    %18 = arith.cmpi slt, %2, %17 : vector<4x256xi32>
    %c0 = arith.constant 0 : index
    %c0_1 = arith.constant 0 : index
    %c0_2 = arith.constant 0 : index
    %19 = vector.load %arg1[%c0, %c0_1, %c0_2] : memref<1x4x384xf32, #tpu.memory_space<vmem>>, vector<1x4x256xf32>
    %20 = vector.shape_cast %19 : vector<1x4x256xf32> to vector<4x256xf32>
    %21 = vector.extract_strided_slice %20 {offsets = [0, 252], sizes = [4, 4], strides = [1, 1]} : vector<4x256xf32> to vector<4x4xf32>
    %22 = vector.extract_strided_slice %20 {offsets = [0, 0], sizes = [4, 252], strides = [1, 1]} : vector<4x256xf32> to vector<4x252xf32>
    %23 = tpu.concatenate %21, %22 in 1 : vector<4x4xf32>, vector<4x252xf32> -> vector<4x256xf32>
    %cst = arith.constant 0.000000e+00 : f32
    %24 = vector.broadcast %cst : f32 to vector<4x256xf32>
    %25 = arith.select %4, %23, %24 : vector<4x256xi1>, vector<4x256xf32>
    %c108 = arith.constant 108 : index
    %c0_3 = arith.constant 0 : index
    %26 = vector.load %arg5[%c108, %c0_3] : memref<144x256xf32, #tpu.memory_space<vmem>>, vector<4x256xf32>
    tpu.vector_store %arg5[%c108, %c0_3], %25 {strides = array<i32>} : memref<144x256xf32, #tpu.memory_space<vmem>>, vector<4x256xf32>,
    %c112 = arith.constant 112 : index
    %c0_4 = arith.constant 0 : index
    %27 = vector.load %arg5[%c112, %c0_4] : memref<144x256xf32, #tpu.memory_space<vmem>>, vector<4x256xf32>
    tpu.vector_store %arg5[%c112, %c0_4], %20 {strides = array<i32>} : memref<144x256xf32, #tpu.memory_space<vmem>>, vector<4x256xf32>,
    %28 = vector.extract_strided_slice %20 {offsets = [0, 4], sizes = [4, 252], strides = [1, 1]} : vector<4x256xf32> to vector<4x252xf32>
    %29 = vector.extract_strided_slice %20 {offsets = [0, 0], sizes = [4, 4], strides = [1, 1]} : vector<4x256xf32> to vector<4x4xf32>
    %30 = tpu.concatenate %28, %29 in 1 : vector<4x252xf32>, vector<4x4xf32> -> vector<4x256xf32>
    %cst_5 = arith.constant 0.000000e+00 : f32
    %31 = vector.broadcast %cst_5 : f32 to vector<4x256xf32>
    %32 = arith.select %6, %30, %31 : vector<4x256xi1>, vector<4x256xf32>
    %c116 = arith.constant 116 : index
    %c0_6 = arith.constant 0 : index
    %33 = vector.load %arg5[%c116, %c0_6] : memref<144x256xf32, #tpu.memory_space<vmem>>, vector<4x256xf32>
    tpu.vector_store %arg5[%c116, %c0_6], %32 {strides = array<i32>} : memref<144x256xf32, #tpu.memory_space<vmem>>, vector<4x256xf32>,
    %c0_7 = arith.constant 0 : index
    %c0_8 = arith.constant 0 : index
    %c16 = arith.constant 16 : index
    %34 = vector.load %arg1[%c0_7, %c0_8, %c16] : memref<1x4x384xf32, #tpu.memory_space<vmem>>, vector<1x4x256xf32>
    %35 = vector.shape_cast %34 : vector<1x4x256xf32> to vector<4x256xf32>
    %36 = vector.extract_strided_slice %35 {offsets = [0, 253], sizes = [4, 3], strides = [1, 1]} : vector<4x256xf32> to vector<4x3xf32>
    %37 = vector.extract_strided_slice %35 {offsets = [0, 0], sizes = [4, 253], strides = [1, 1]} : vector<4x256xf32> to vector<4x253xf32>
    %38 = tpu.concatenate %36, %37 in 1 : vector<4x3xf32>, vector<4x253xf32> -> vector<4x256xf32>
    %cst_9 = arith.constant 0.000000e+00 : f32
    %39 = vector.broadcast %cst_9 : f32 to vector<4x256xf32>
    %40 = arith.select %8, %38, %39 : vector<4x256xi1>, vector<4x256xf32>
    %c72 = arith.constant 72 : index
    %c0_10 = arith.constant 0 : index
    %41 = vector.load %arg5[%c72, %c0_10] : memref<144x256xf32, #tpu.memory_space<vmem>>, vector<4x256xf32>
    tpu.vector_store %arg5[%c72, %c0_10], %40 {strides = array<i32>} : memref<144x256xf32, #tpu.memory_space<vmem>>, vector<4x256xf32>,
    %c76 = arith.constant 76 : index
    %c0_11 = arith.constant 0 : index
    %42 = vector.load %arg5[%c76, %c0_11] : memref<144x256xf32, #tpu.memory_space<vmem>>, vector<4x256xf32>
    tpu.vector_store %arg5[%c76, %c0_11], %35 {strides = array<i32>} : memref<144x256xf32, #tpu.memory_space<vmem>>, vector<4x256xf32>,
    %43 = vector.extract_strided_slice %35 {offsets = [0, 3], sizes = [4, 253], strides = [1, 1]} : vector<4x256xf32> to vector<4x253xf32>
    %44 = vector.extract_strided_slice %35 {offsets = [0, 0], sizes = [4, 3], strides = [1, 1]} : vector<4x256xf32> to vector<4x3xf32>
    %45 = tpu.concatenate %43, %44 in 1 : vector<4x253xf32>, vector<4x3xf32> -> vector<4x256xf32>
    %cst_12 = arith.constant 0.000000e+00 : f32
    %46 = vector.broadcast %cst_12 : f32 to vector<4x256xf32>
    %47 = arith.select %10, %45, %46 : vector<4x256xi1>, vector<4x256xf32>
    %c80 = arith.constant 80 : index
    %c0_13 = arith.constant 0 : index
    %48 = vector.load %arg5[%c80, %c0_13] : memref<144x256xf32, #tpu.memory_space<vmem>>, vector<4x256xf32>
    tpu.vector_store %arg5[%c80, %c0_13], %47 {strides = array<i32>} : memref<144x256xf32, #tpu.memory_space<vmem>>, vector<4x256xf32>,
    %c0_14 = arith.constant 0 : index
    %c0_15 = arith.constant 0 : index
    %c32 = arith.constant 32 : index
    %49 = vector.load %arg1[%c0_14, %c0_15, %c32] : memref<1x4x384xf32, #tpu.memory_space<vmem>>, vector<1x4x256xf32>
    %50 = vector.shape_cast %49 : vector<1x4x256xf32> to vector<4x256xf32>
    %51 = vector.extract_strided_slice %50 {offsets = [0, 254], sizes = [4, 2], strides = [1, 1]} : vector<4x256xf32> to vector<4x2xf32>
    %52 = vector.extract_strided_slice %50 {offsets = [0, 0], sizes = [4, 254], strides = [1, 1]} : vector<4x256xf32> to vector<4x254xf32>
    %53 = tpu.concatenate %51, %52 in 1 : vector<4x2xf32>, vector<4x254xf32> -> vector<4x256xf32>
    %cst_16 = arith.constant 0.000000e+00 : f32
    %54 = vector.broadcast %cst_16 : f32 to vector<4x256xf32>
    %55 = arith.select %12, %53, %54 : vector<4x256xi1>, vector<4x256xf32>
    %c36 = arith.constant 36 : index
    %c0_17 = arith.constant 0 : index
    %56 = vector.load %arg5[%c36, %c0_17] : memref<144x256xf32, #tpu.memory_space<vmem>>, vector<4x256xf32>
    tpu.vector_store %arg5[%c36, %c0_17], %55 {strides = array<i32>} : memref<144x256xf32, #tpu.memory_space<vmem>>, vector<4x256xf32>,
    %c40 = arith.constant 40 : index
    %c0_18 = arith.constant 0 : index
    %57 = vector.load %arg5[%c40, %c0_18] : memref<144x256xf32, #tpu.memory_space<vmem>>, vector<4x256xf32>
    tpu.vector_store %arg5[%c40, %c0_18], %50 {strides = array<i32>} : memref<144x256xf32, #tpu.memory_space<vmem>>, vector<4x256xf32>,
    %58 = vector.extract_strided_slice %50 {offsets = [0, 2], sizes = [4, 254], strides = [1, 1]} : vector<4x256xf32> to vector<4x254xf32>
    %59 = vector.extract_strided_slice %50 {offsets = [0, 0], sizes = [4, 2], strides = [1, 1]} : vector<4x256xf32> to vector<4x2xf32>
    %60 = tpu.concatenate %58, %59 in 1 : vector<4x254xf32>, vector<4x2xf32> -> vector<4x256xf32>
    %cst_19 = arith.constant 0.000000e+00 : f32
    %61 = vector.broadcast %cst_19 : f32 to vector<4x256xf32>
    %62 = arith.select %14, %60, %61 : vector<4x256xi1>, vector<4x256xf32>
    %c44 = arith.constant 44 : index
    %c0_20 = arith.constant 0 : index
    %63 = vector.load %arg5[%c44, %c0_20] : memref<144x256xf32, #tpu.memory_space<vmem>>, vector<4x256xf32>
    tpu.vector_store %arg5[%c44, %c0_20], %62 {strides = array<i32>} : memref<144x256xf32, #tpu.memory_space<vmem>>, vector<4x256xf32>,
    %c0_21 = arith.constant 0 : index
    %c0_22 = arith.constant 0 : index
    %c48 = arith.constant 48 : index
    %64 = vector.load %arg1[%c0_21, %c0_22, %c48] : memref<1x4x384xf32, #tpu.memory_space<vmem>>, vector<1x4x256xf32>
    %65 = vector.shape_cast %64 : vector<1x4x256xf32> to vector<4x256xf32>
    %66 = vector.extract_strided_slice %65 {offsets = [0, 255], sizes = [4, 1], strides = [1, 1]} : vector<4x256xf32> to vector<4x1xf32>
    %67 = vector.extract_strided_slice %65 {offsets = [0, 0], sizes = [4, 255], strides = [1, 1]} : vector<4x256xf32> to vector<4x255xf32>
    %68 = tpu.concatenate %66, %67 in 1 : vector<4x1xf32>, vector<4x255xf32> -> vector<4x256xf32>
    %cst_23 = arith.constant 0.000000e+00 : f32
    %69 = vector.broadcast %cst_23 : f32 to vector<4x256xf32>
    %70 = arith.select %16, %68, %69 : vector<4x256xi1>, vector<4x256xf32>
    %c0_24 = arith.constant 0 : index
    %c0_25 = arith.constant 0 : index
    %71 = vector.load %arg5[%c0_24, %c0_25] : memref<144x256xf32, #tpu.memory_space<vmem>>, vector<4x256xf32>
    tpu.vector_store %arg5[%c0_24, %c0_25], %70 {strides = array<i32>} : memref<144x256xf32, #tpu.memory_space<vmem>>, vector<4x256xf32>,
    %c4 = arith.constant 4 : index
    %c0_26 = arith.constant 0 : index
    %72 = vector.load %arg5[%c4, %c0_26] : memref<144x256xf32, #tpu.memory_space<vmem>>, vector<4x256xf32>
    tpu.vector_store %arg5[%c4, %c0_26], %65 {strides = array<i32>} : memref<144x256xf32, #tpu.memory_space<vmem>>, vector<4x256xf32>,
    %73 = vector.extract_strided_slice %65 {offsets = [0, 1], sizes = [4, 255], strides = [1, 1]} : vector<4x256xf32> to vector<4x255xf32>
    %74 = vector.extract_strided_slice %65 {offsets = [0, 0], sizes = [4, 1], strides = [1, 1]} : vector<4x256xf32> to vector<4x1xf32>
    %75 = tpu.concatenate %73, %74 in 1 : vector<4x255xf32>, vector<4x1xf32> -> vector<4x256xf32>
    %cst_27 = arith.constant 0.000000e+00 : f32
    %76 = vector.broadcast %cst_27 : f32 to vector<4x256xf32>
    %77 = arith.select %18, %75, %76 : vector<4x256xi1>, vector<4x256xf32>
    %c8 = arith.constant 8 : index
    %c0_28 = arith.constant 0 : index
    %78 = vector.load %arg5[%c8, %c0_28] : memref<144x256xf32, #tpu.memory_space<vmem>>, vector<4x256xf32>
    tpu.vector_store %arg5[%c8, %c0_28], %77 {strides = array<i32>} : memref<144x256xf32, #tpu.memory_space<vmem>>, vector<4x256xf32>,
    %c0_29 = arith.constant 0 : index
    %c0_30 = arith.constant 0 : index
    %c64 = arith.constant 64 : index
    %79 = vector.load %arg1[%c0_29, %c0_30, %c64] : memref<1x4x384xf32, #tpu.memory_space<vmem>>, vector<1x4x256xf32>
    %80 = vector.shape_cast %79 : vector<1x4x256xf32> to vector<4x256xf32>
    %81 = vector.extract_strided_slice %80 {offsets = [0, 255], sizes = [4, 1], strides = [1, 1]} : vector<4x256xf32> to vector<4x1xf32>
    %82 = vector.extract_strided_slice %80 {offsets = [0, 0], sizes = [4, 255], strides = [1, 1]} : vector<4x256xf32> to vector<4x255xf32>
    %83 = tpu.concatenate %81, %82 in 1 : vector<4x1xf32>, vector<4x255xf32> -> vector<4x256xf32>
    %cst_31 = arith.constant 0.000000e+00 : f32
    %84 = vector.broadcast %cst_31 : f32 to vector<4x256xf32>
    %85 = arith.select %16, %83, %84 : vector<4x256xi1>, vector<4x256xf32>
    %c12 = arith.constant 12 : index
    %c0_32 = arith.constant 0 : index
    %86 = vector.load %arg5[%c12, %c0_32] : memref<144x256xf32, #tpu.memory_space<vmem>>, vector<4x256xf32>
    tpu.vector_store %arg5[%c12, %c0_32], %85 {strides = array<i32>} : memref<144x256xf32, #tpu.memory_space<vmem>>, vector<4x256xf32>,
    %c16_33 = arith.constant 16 : index
    %c0_34 = arith.constant 0 : index
    %87 = vector.load %arg5[%c16_33, %c0_34] : memref<144x256xf32, #tpu.memory_space<vmem>>, vector<4x256xf32>
    tpu.vector_store %arg5[%c16_33, %c0_34], %80 {strides = array<i32>} : memref<144x256xf32, #tpu.memory_space<vmem>>, vector<4x256xf32>,
    %88 = vector.extract_strided_slice %80 {offsets = [0, 1], sizes = [4, 255], strides = [1, 1]} : vector<4x256xf32> to vector<4x255xf32>
    %89 = vector.extract_strided_slice %80 {offsets = [0, 0], sizes = [4, 1], strides = [1, 1]} : vector<4x256xf32> to vector<4x1xf32>
    %90 = tpu.concatenate %88, %89 in 1 : vector<4x255xf32>, vector<4x1xf32> -> vector<4x256xf32>
    %cst_35 = arith.constant 0.000000e+00 : f32
    %91 = vector.broadcast %cst_35 : f32 to vector<4x256xf32>
    %92 = arith.select %18, %90, %91 : vector<4x256xi1>, vector<4x256xf32>
    %c20 = arith.constant 20 : index
    %c0_36 = arith.constant 0 : index
    %93 = vector.load %arg5[%c20, %c0_36] : memref<144x256xf32, #tpu.memory_space<vmem>>, vector<4x256xf32>
    tpu.vector_store %arg5[%c20, %c0_36], %92 {strides = array<i32>} : memref<144x256xf32, #tpu.memory_space<vmem>>, vector<4x256xf32>,
    %94 = vector.extract_strided_slice %80 {offsets = [0, 254], sizes = [4, 2], strides = [1, 1]} : vector<4x256xf32> to vector<4x2xf32>
    %95 = vector.extract_strided_slice %80 {offsets = [0, 0], sizes = [4, 254], strides = [1, 1]} : vector<4x256xf32> to vector<4x254xf32>
    %96 = tpu.concatenate %94, %95 in 1 : vector<4x2xf32>, vector<4x254xf32> -> vector<4x256xf32>
    %cst_37 = arith.constant 0.000000e+00 : f32
    %97 = vector.broadcast %cst_37 : f32 to vector<4x256xf32>
    %98 = arith.select %12, %96, %97 : vector<4x256xi1>, vector<4x256xf32>
    %c48_38 = arith.constant 48 : index
    %c0_39 = arith.constant 0 : index
    %99 = vector.load %arg5[%c48_38, %c0_39] : memref<144x256xf32, #tpu.memory_space<vmem>>, vector<4x256xf32>
    tpu.vector_store %arg5[%c48_38, %c0_39], %98 {strides = array<i32>} : memref<144x256xf32, #tpu.memory_space<vmem>>, vector<4x256xf32>,
    %c52 = arith.constant 52 : index
    %c0_40 = arith.constant 0 : index
    %100 = vector.load %arg5[%c52, %c0_40] : memref<144x256xf32, #tpu.memory_space<vmem>>, vector<4x256xf32>
    tpu.vector_store %arg5[%c52, %c0_40], %80 {strides = array<i32>} : memref<144x256xf32, #tpu.memory_space<vmem>>, vector<4x256xf32>,
    %101 = vector.extract_strided_slice %80 {offsets = [0, 2], sizes = [4, 254], strides = [1, 1]} : vector<4x256xf32> to vector<4x254xf32>
    %102 = vector.extract_strided_slice %80 {offsets = [0, 0], sizes = [4, 2], strides = [1, 1]} : vector<4x256xf32> to vector<4x2xf32>
    %103 = tpu.concatenate %101, %102 in 1 : vector<4x254xf32>, vector<4x2xf32> -> vector<4x256xf32>
    %cst_41 = arith.constant 0.000000e+00 : f32
    %104 = vector.broadcast %cst_41 : f32 to vector<4x256xf32>
    %105 = arith.select %14, %103, %104 : vector<4x256xi1>, vector<4x256xf32>
    %c56 = arith.constant 56 : index
    %c0_42 = arith.constant 0 : index
    %106 = vector.load %arg5[%c56, %c0_42] : memref<144x256xf32, #tpu.memory_space<vmem>>, vector<4x256xf32>
    tpu.vector_store %arg5[%c56, %c0_42], %105 {strides = array<i32>} : memref<144x256xf32, #tpu.memory_space<vmem>>, vector<4x256xf32>,
    %107 = vector.extract_strided_slice %80 {offsets = [0, 253], sizes = [4, 3], strides = [1, 1]} : vector<4x256xf32> to vector<4x3xf32>
    %108 = vector.extract_strided_slice %80 {offsets = [0, 0], sizes = [4, 253], strides = [1, 1]} : vector<4x256xf32> to vector<4x253xf32>
    %109 = tpu.concatenate %107, %108 in 1 : vector<4x3xf32>, vector<4x253xf32> -> vector<4x256xf32>
    %cst_43 = arith.constant 0.000000e+00 : f32
    %110 = vector.broadcast %cst_43 : f32 to vector<4x256xf32>
    %111 = arith.select %8, %109, %110 : vector<4x256xi1>, vector<4x256xf32>
    %c84 = arith.constant 84 : index
    %c0_44 = arith.constant 0 : index
    %112 = vector.load %arg5[%c84, %c0_44] : memref<144x256xf32, #tpu.memory_space<vmem>>, vector<4x256xf32>
    tpu.vector_store %arg5[%c84, %c0_44], %111 {strides = array<i32>} : memref<144x256xf32, #tpu.memory_space<vmem>>, vector<4x256xf32>,
    %c88 = arith.constant 88 : index
    %c0_45 = arith.constant 0 : index
    %113 = vector.load %arg5[%c88, %c0_45] : memref<144x256xf32, #tpu.memory_space<vmem>>, vector<4x256xf32>
    tpu.vector_store %arg5[%c88, %c0_45], %80 {strides = array<i32>} : memref<144x256xf32, #tpu.memory_space<vmem>>, vector<4x256xf32>,
    %114 = vector.extract_strided_slice %80 {offsets = [0, 3], sizes = [4, 253], strides = [1, 1]} : vector<4x256xf32> to vector<4x253xf32>
    %115 = vector.extract_strided_slice %80 {offsets = [0, 0], sizes = [4, 3], strides = [1, 1]} : vector<4x256xf32> to vector<4x3xf32>
    %116 = tpu.concatenate %114, %115 in 1 : vector<4x253xf32>, vector<4x3xf32> -> vector<4x256xf32>
    %cst_46 = arith.constant 0.000000e+00 : f32
    %117 = vector.broadcast %cst_46 : f32 to vector<4x256xf32>
    %118 = arith.select %10, %116, %117 : vector<4x256xi1>, vector<4x256xf32>
    %c92 = arith.constant 92 : index
    %c0_47 = arith.constant 0 : index
    %119 = vector.load %arg5[%c92, %c0_47] : memref<144x256xf32, #tpu.memory_space<vmem>>, vector<4x256xf32>
    tpu.vector_store %arg5[%c92, %c0_47], %118 {strides = array<i32>} : memref<144x256xf32, #tpu.memory_space<vmem>>, vector<4x256xf32>,
    %120 = vector.extract_strided_slice %80 {offsets = [0, 252], sizes = [4, 4], strides = [1, 1]} : vector<4x256xf32> to vector<4x4xf32>
    %121 = vector.extract_strided_slice %80 {offsets = [0, 0], sizes = [4, 252], strides = [1, 1]} : vector<4x256xf32> to vector<4x252xf32>
    %122 = tpu.concatenate %120, %121 in 1 : vector<4x4xf32>, vector<4x252xf32> -> vector<4x256xf32>
    %cst_48 = arith.constant 0.000000e+00 : f32
    %123 = vector.broadcast %cst_48 : f32 to vector<4x256xf32>
    %124 = arith.select %4, %122, %123 : vector<4x256xi1>, vector<4x256xf32>
    %c120 = arith.constant 120 : index
    %c0_49 = arith.constant 0 : index
    %125 = vector.load %arg5[%c120, %c0_49] : memref<144x256xf32, #tpu.memory_space<vmem>>, vector<4x256xf32>
    tpu.vector_store %arg5[%c120, %c0_49], %124 {strides = array<i32>} : memref<144x256xf32, #tpu.memory_space<vmem>>, vector<4x256xf32>,
    %c124 = arith.constant 124 : index
    %c0_50 = arith.constant 0 : index
    %126 = vector.load %arg5[%c124, %c0_50] : memref<144x256xf32, #tpu.memory_space<vmem>>, vector<4x256xf32>
    tpu.vector_store %arg5[%c124, %c0_50], %80 {strides = array<i32>} : memref<144x256xf32, #tpu.memory_space<vmem>>, vector<4x256xf32>,
    %127 = vector.extract_strided_slice %80 {offsets = [0, 4], sizes = [4, 252], strides = [1, 1]} : vector<4x256xf32> to vector<4x252xf32>
    %128 = vector.extract_strided_slice %80 {offsets = [0, 0], sizes = [4, 4], strides = [1, 1]} : vector<4x256xf32> to vector<4x4xf32>
    %129 = tpu.concatenate %127, %128 in 1 : vector<4x252xf32>, vector<4x4xf32> -> vector<4x256xf32>
    %cst_51 = arith.constant 0.000000e+00 : f32
    %130 = vector.broadcast %cst_51 : f32 to vector<4x256xf32>
    %131 = arith.select %6, %129, %130 : vector<4x256xi1>, vector<4x256xf32>
    %c128 = arith.constant 128 : index
    %c0_52 = arith.constant 0 : index
    %132 = vector.load %arg5[%c128, %c0_52] : memref<144x256xf32, #tpu.memory_space<vmem>>, vector<4x256xf32>
    tpu.vector_store %arg5[%c128, %c0_52], %131 {strides = array<i32>} : memref<144x256xf32, #tpu.memory_space<vmem>>, vector<4x256xf32>,
    %c0_53 = arith.constant 0 : index
    %c0_54 = arith.constant 0 : index
    %c80_55 = arith.constant 80 : index
    %133 = vector.load %arg1[%c0_53, %c0_54, %c80_55] : memref<1x4x384xf32, #tpu.memory_space<vmem>>, vector<1x4x256xf32>
    %134 = vector.shape_cast %133 : vector<1x4x256xf32> to vector<4x256xf32>
    %135 = vector.extract_strided_slice %134 {offsets = [0, 255], sizes = [4, 1], strides = [1, 1]} : vector<4x256xf32> to vector<4x1xf32>
    %136 = vector.extract_strided_slice %134 {offsets = [0, 0], sizes = [4, 255], strides = [1, 1]} : vector<4x256xf32> to vector<4x255xf32>
    %137 = tpu.concatenate %135, %136 in 1 : vector<4x1xf32>, vector<4x255xf32> -> vector<4x256xf32>
    %cst_56 = arith.constant 0.000000e+00 : f32
    %138 = vector.broadcast %cst_56 : f32 to vector<4x256xf32>
    %139 = arith.select %16, %137, %138 : vector<4x256xi1>, vector<4x256xf32>
    %c24 = arith.constant 24 : index
    %c0_57 = arith.constant 0 : index
    %140 = vector.load %arg5[%c24, %c0_57] : memref<144x256xf32, #tpu.memory_space<vmem>>, vector<4x256xf32>
    tpu.vector_store %arg5[%c24, %c0_57], %139 {strides = array<i32>} : memref<144x256xf32, #tpu.memory_space<vmem>>, vector<4x256xf32>,
    %c28 = arith.constant 28 : index
    %c0_58 = arith.constant 0 : index
    %141 = vector.load %arg5[%c28, %c0_58] : memref<144x256xf32, #tpu.memory_space<vmem>>, vector<4x256xf32>
    tpu.vector_store %arg5[%c28, %c0_58], %134 {strides = array<i32>} : memref<144x256xf32, #tpu.memory_space<vmem>>, vector<4x256xf32>,
    %142 = vector.extract_strided_slice %134 {offsets = [0, 1], sizes = [4, 255], strides = [1, 1]} : vector<4x256xf32> to vector<4x255xf32>
    %143 = vector.extract_strided_slice %134 {offsets = [0, 0], sizes = [4, 1], strides = [1, 1]} : vector<4x256xf32> to vector<4x1xf32>
    %144 = tpu.concatenate %142, %143 in 1 : vector<4x255xf32>, vector<4x1xf32> -> vector<4x256xf32>
    %cst_59 = arith.constant 0.000000e+00 : f32
    %145 = vector.broadcast %cst_59 : f32 to vector<4x256xf32>
    %146 = arith.select %18, %144, %145 : vector<4x256xi1>, vector<4x256xf32>
    %c32_60 = arith.constant 32 : index
    %c0_61 = arith.constant 0 : index
    %147 = vector.load %arg5[%c32_60, %c0_61] : memref<144x256xf32, #tpu.memory_space<vmem>>, vector<4x256xf32>
    tpu.vector_store %arg5[%c32_60, %c0_61], %146 {strides = array<i32>} : memref<144x256xf32, #tpu.memory_space<vmem>>, vector<4x256xf32>,
    %c0_62 = arith.constant 0 : index
    %c0_63 = arith.constant 0 : index
    %c96 = arith.constant 96 : index
    %148 = vector.load %arg1[%c0_62, %c0_63, %c96] : memref<1x4x384xf32, #tpu.memory_space<vmem>>, vector<1x4x256xf32>
    %149 = vector.shape_cast %148 : vector<1x4x256xf32> to vector<4x256xf32>
    %150 = vector.extract_strided_slice %149 {offsets = [0, 254], sizes = [4, 2], strides = [1, 1]} : vector<4x256xf32> to vector<4x2xf32>
    %151 = vector.extract_strided_slice %149 {offsets = [0, 0], sizes = [4, 254], strides = [1, 1]} : vector<4x256xf32> to vector<4x254xf32>
    %152 = tpu.concatenate %150, %151 in 1 : vector<4x2xf32>, vector<4x254xf32> -> vector<4x256xf32>
    %cst_64 = arith.constant 0.000000e+00 : f32
    %153 = vector.broadcast %cst_64 : f32 to vector<4x256xf32>
    %154 = arith.select %12, %152, %153 : vector<4x256xi1>, vector<4x256xf32>
    %c60 = arith.constant 60 : index
    %c0_65 = arith.constant 0 : index
    %155 = vector.load %arg5[%c60, %c0_65] : memref<144x256xf32, #tpu.memory_space<vmem>>, vector<4x256xf32>
    tpu.vector_store %arg5[%c60, %c0_65], %154 {strides = array<i32>} : memref<144x256xf32, #tpu.memory_space<vmem>>, vector<4x256xf32>,
    %c64_66 = arith.constant 64 : index
    %c0_67 = arith.constant 0 : index
    %156 = vector.load %arg5[%c64_66, %c0_67] : memref<144x256xf32, #tpu.memory_space<vmem>>, vector<4x256xf32>
    tpu.vector_store %arg5[%c64_66, %c0_67], %149 {strides = array<i32>} : memref<144x256xf32, #tpu.memory_space<vmem>>, vector<4x256xf32>,
    %157 = vector.extract_strided_slice %149 {offsets = [0, 2], sizes = [4, 254], strides = [1, 1]} : vector<4x256xf32> to vector<4x254xf32>
    %158 = vector.extract_strided_slice %149 {offsets = [0, 0], sizes = [4, 2], strides = [1, 1]} : vector<4x256xf32> to vector<4x2xf32>
    %159 = tpu.concatenate %157, %158 in 1 : vector<4x254xf32>, vector<4x2xf32> -> vector<4x256xf32>
    %cst_68 = arith.constant 0.000000e+00 : f32
    %160 = vector.broadcast %cst_68 : f32 to vector<4x256xf32>
    %161 = arith.select %14, %159, %160 : vector<4x256xi1>, vector<4x256xf32>
    %c68 = arith.constant 68 : index
    %c0_69 = arith.constant 0 : index
    %162 = vector.load %arg5[%c68, %c0_69] : memref<144x256xf32, #tpu.memory_space<vmem>>, vector<4x256xf32>
    tpu.vector_store %arg5[%c68, %c0_69], %161 {strides = array<i32>} : memref<144x256xf32, #tpu.memory_space<vmem>>, vector<4x256xf32>,
    %c0_70 = arith.constant 0 : index
    %c0_71 = arith.constant 0 : index
    %c112_72 = arith.constant 112 : index
    %163 = vector.load %arg1[%c0_70, %c0_71, %c112_72] : memref<1x4x384xf32, #tpu.memory_space<vmem>>, vector<1x4x256xf32>
    %164 = vector.shape_cast %163 : vector<1x4x256xf32> to vector<4x256xf32>
    %165 = vector.extract_strided_slice %164 {offsets = [0, 253], sizes = [4, 3], strides = [1, 1]} : vector<4x256xf32> to vector<4x3xf32>
    %166 = vector.extract_strided_slice %164 {offsets = [0, 0], sizes = [4, 253], strides = [1, 1]} : vector<4x256xf32> to vector<4x253xf32>
    %167 = tpu.concatenate %165, %166 in 1 : vector<4x3xf32>, vector<4x253xf32> -> vector<4x256xf32>
    %cst_73 = arith.constant 0.000000e+00 : f32
    %168 = vector.broadcast %cst_73 : f32 to vector<4x256xf32>
    %169 = arith.select %8, %167, %168 : vector<4x256xi1>, vector<4x256xf32>
    %c96_74 = arith.constant 96 : index
    %c0_75 = arith.constant 0 : index
    %170 = vector.load %arg5[%c96_74, %c0_75] : memref<144x256xf32, #tpu.memory_space<vmem>>, vector<4x256xf32>
    tpu.vector_store %arg5[%c96_74, %c0_75], %169 {strides = array<i32>} : memref<144x256xf32, #tpu.memory_space<vmem>>, vector<4x256xf32>,
    %c100 = arith.constant 100 : index
    %c0_76 = arith.constant 0 : index
    %171 = vector.load %arg5[%c100, %c0_76] : memref<144x256xf32, #tpu.memory_space<vmem>>, vector<4x256xf32>
    tpu.vector_store %arg5[%c100, %c0_76], %164 {strides = array<i32>} : memref<144x256xf32, #tpu.memory_space<vmem>>, vector<4x256xf32>,
    %172 = vector.extract_strided_slice %164 {offsets = [0, 3], sizes = [4, 253], strides = [1, 1]} : vector<4x256xf32> to vector<4x253xf32>
    %173 = vector.extract_strided_slice %164 {offsets = [0, 0], sizes = [4, 3], strides = [1, 1]} : vector<4x256xf32> to vector<4x3xf32>
    %174 = tpu.concatenate %172, %173 in 1 : vector<4x253xf32>, vector<4x3xf32> -> vector<4x256xf32>
    %cst_77 = arith.constant 0.000000e+00 : f32
    %175 = vector.broadcast %cst_77 : f32 to vector<4x256xf32>
    %176 = arith.select %10, %174, %175 : vector<4x256xi1>, vector<4x256xf32>
    %c104 = arith.constant 104 : index
    %c0_78 = arith.constant 0 : index
    %177 = vector.load %arg5[%c104, %c0_78] : memref<144x256xf32, #tpu.memory_space<vmem>>, vector<4x256xf32>
    tpu.vector_store %arg5[%c104, %c0_78], %176 {strides = array<i32>} : memref<144x256xf32, #tpu.memory_space<vmem>>, vector<4x256xf32>,
    %c0_79 = arith.constant 0 : index
    %c0_80 = arith.constant 0 : index
    %c128_81 = arith.constant 128 : index
    %178 = vector.load %arg1[%c0_79, %c0_80, %c128_81] : memref<1x4x384xf32, #tpu.memory_space<vmem>>, vector<1x4x256xf32>
    %179 = vector.shape_cast %178 : vector<1x4x256xf32> to vector<4x256xf32>
    %180 = vector.extract_strided_slice %179 {offsets = [0, 252], sizes = [4, 4], strides = [1, 1]} : vector<4x256xf32> to vector<4x4xf32>
    %181 = vector.extract_strided_slice %179 {offsets = [0, 0], sizes = [4, 252], strides = [1, 1]} : vector<4x256xf32> to vector<4x252xf32>
    %182 = tpu.concatenate %180, %181 in 1 : vector<4x4xf32>, vector<4x252xf32> -> vector<4x256xf32>
    %cst_82 = arith.constant 0.000000e+00 : f32
    %183 = vector.broadcast %cst_82 : f32 to vector<4x256xf32>
    %184 = arith.select %4, %182, %183 : vector<4x256xi1>, vector<4x256xf32>
    %c132 = arith.constant 132 : index
    %c0_83 = arith.constant 0 : index
    %185 = vector.load %arg5[%c132, %c0_83] : memref<144x256xf32, #tpu.memory_space<vmem>>, vector<4x256xf32>
    tpu.vector_store %arg5[%c132, %c0_83], %184 {strides = array<i32>} : memref<144x256xf32, #tpu.memory_space<vmem>>, vector<4x256xf32>,
    %c136 = arith.constant 136 : index
    %c0_84 = arith.constant 0 : index
    %186 = vector.load %arg5[%c136, %c0_84] : memref<144x256xf32, #tpu.memory_space<vmem>>, vector<4x256xf32>
    tpu.vector_store %arg5[%c136, %c0_84], %179 {strides = array<i32>} : memref<144x256xf32, #tpu.memory_space<vmem>>, vector<4x256xf32>,
    %187 = vector.extract_strided_slice %179 {offsets = [0, 4], sizes = [4, 252], strides = [1, 1]} : vector<4x256xf32> to vector<4x252xf32>
    %188 = vector.extract_strided_slice %179 {offsets = [0, 0], sizes = [4, 4], strides = [1, 1]} : vector<4x256xf32> to vector<4x4xf32>
    %189 = tpu.concatenate %187, %188 in 1 : vector<4x252xf32>, vector<4x4xf32> -> vector<4x256xf32>
    %cst_85 = arith.constant 0.000000e+00 : f32
    %190 = vector.broadcast %cst_85 : f32 to vector<4x256xf32>
    %191 = arith.select %6, %189, %190 : vector<4x256xi1>, vector<4x256xf32>
    %c140 = arith.constant 140 : index
    %c0_86 = arith.constant 0 : index
    %192 = vector.load %arg5[%c140, %c0_86] : memref<144x256xf32, #tpu.memory_space<vmem>>, vector<4x256xf32>
    tpu.vector_store %arg5[%c140, %c0_86], %191 {strides = array<i32>} : memref<144x256xf32, #tpu.memory_space<vmem>>, vector<4x256xf32>,
    %c0_87 = arith.constant 0 : index
    %c0_88 = arith.constant 0 : index
    %193 = vector.load %arg2[%c0_87, %c0_88] : memref<4x144xf32, #tpu.memory_space<vmem>>, vector<4x144xf32>
    %c0_89 = arith.constant 0 : index
    %c0_90 = arith.constant 0 : index
    %194 = vector.load %arg5[%c0_89, %c0_90] : memref<144x256xf32, #tpu.memory_space<vmem>>, vector<144x256xf32>
    %cst_91 = arith.constant dense<0.000000e+00> : vector<4x256xf32>
    %195 = tpu.matmul %193, %194, %cst_91 {dimension_numbers = #tpu.dot_dimension_numbers<[1], [0], [0], [1], [0, 0, 1, 1], [], []>} : vector<4x144xf32>, vector<144x256xf32>, vector<4x256xf32> -> vector<4x256xf32>
    %c0_92 = arith.constant 0 : index
    %c0_93 = arith.constant 0 : index
    %196 = vector.load %arg3[%c0_92, %c0_93] : memref<4x1xf32, #tpu.memory_space<vmem>>, vector<4x1xf32>
    %197 = vector.broadcast %196 : vector<4x1xf32> to vector<4x256xf32>
    %198 = arith.addf %195, %197 : vector<4x256xf32>
    %c0_94 = arith.constant 0 : index
    %c0_95 = arith.constant 0 : index
    %c0_96 = arith.constant 0 : index
    %199 = vector.load %arg4[%c0_94, %c0_95, %c0_96] : memref<1x4x256xf32, #tpu.memory_space<vmem>>, vector<1x4x256xf32>
    %200 = vector.shape_cast %199 : vector<1x4x256xf32> to vector<4x256xf32>
    %201 = vector.shape_cast %198 : vector<4x256xf32> to vector<1x4x256xf32>
    tpu.vector_store %arg4[%c0_94, %c0_95, %c0_96], %201 {strides = array<i32>} : memref<1x4x256xf32, #tpu.memory_space<vmem>>, vector<1x4x256xf32>,
    return
  }
  func.func @transform_0(%arg0: i32) -> (i32, i32, i32) {
    %c0_i32 = arith.constant 0 : i32
    %c0_i32_0 = arith.constant 0 : i32
    %c0_i32_1 = arith.constant 0 : i32
    return %arg0, %c0_i32, %c0_i32_0 : i32, i32, i32
  }
  func.func @transform_1(%arg0: i32) -> (i32, i32) {
    %c0_i32 = arith.constant 0 : i32
    %c0_i32_0 = arith.constant 0 : i32
    %c0_i32_1 = arith.constant 0 : i32
    return %c0_i32, %c0_i32_0 : i32, i32
  }
  func.func @transform_2(%arg0: i32) -> (i32, i32) {
    %c0_i32 = arith.constant 0 : i32
    %c0_i32_0 = arith.constant 0 : i32
    %c0_i32_1 = arith.constant 0 : i32
    return %c0_i32, %c0_i32_0 : i32, i32
  }
  func.func @transform_3(%arg0: i32) -> (i32, i32, i32) {
    %c0_i32 = arith.constant 0 : i32
    %c0_i32_0 = arith.constant 0 : i32
    %c0_i32_1 = arith.constant 0 : i32
    return %arg0, %c0_i32, %c0_i32_0 : i32, i32, i32
  }
}

</mosaic_0001>

<llo_original>
// kernel: tpu_custom_call.1
$region0: #{tpu_custom_call.1}
  #allocation0 [shape = 'u32[]', space=smem, size = 0x4, offset = 0x4, fixed_abs, tag = 'smem constant byte address 0x4 - core index']
  #allocation1 [shape = 'u32[144,128]{1,0:T(1,128)}', space=vmem, size = 0x12000, scoped, tag = 'internal scratch']
  #allocation2 [shape = 'f32[144,256]{1,0:T(8,128)}', space=vmem, size = 0x24000, scoped, tag = 'scratch operand']
  %s0 = inlined_call_operand.hbm [shape: f32[2,4,384], index: 0, kind: input, shape index: {}]
  %s1 = inlined_call_operand.vmem [shape: f32[4,144], index: 1, kind: input, shape index: {}]
  %s2 = inlined_call_operand.vmem [shape: f32[4,1], index: 2, kind: input, shape index: {}]
  %s3 = inlined_call_operand.hbm [shape: f32[2,4,256], index: 3, kind: output, shape index: {}]
  %s4 = sld [smem:[#allocation0]]
  $region49: #{tpu_custom_call.1} parent=0
    _
  %s6 = ssub.s32 1, %s4
  %s7 = scalar_select 0, %s6, %s4
  $region1: #{tpu_custom_call.1} parent=0
    #allocation3 [shape = 'u8[12288]{0}', space=vmem, size = 0x3000, scoped, tag = 'input window, operand 0']
    #allocation4 [shape = 's32[2]{0}', space=sflag, size = 0x8, scoped, tag = 'scoped memory for tpu_custom_call.1']
    #allocation5 [shape = 's32[2]{0}', space=sflag, size = 0x8, scoped, tag = 'scoped memory for tpu_custom_call.1']
    #allocation6 [shape = 'u8[8192]{0}', space=vmem, size = 0x2000, scoped, tag = 'output window, operand 0']
    %8 = vsyncpa [#allocation4], 0
    %s9 = scalar_lea.sflag [#allocation4], 1
    %10 = vsyncpa %s9, 0
    %11 = vsyncpa [#allocation5], 0
    %s12 = scalar_lea.sflag [#allocation5], 1
    %13 = vsyncpa %s12, 0
    loop: start=0, step=1, limit=4
    $region2: #{tpu_custom_call.1} parent=1 // loop_pre_header
      _
    $region3: #{tpu_custom_call.1} parent=1 // loop_header
      %s15 = sphi 0, %s19
      %p16 = scmp.ge.s32.totalorder %s15, 4
      %s25 = sphi 0, %s27
      %s28 = sphi 0, %s25
      %s29 = sphi 0, %s28
      %s45 = sphi 0, %s29
      %s49 = sphi 0, %s49
      %s51 = sphi 0, %s49
      %s52 = sphi 0, %s51
      %s66 = sphi 0, %s52
      %s70 = sphi 0, %s70
      %s72 = sphi 0, %s70
      %s73 = sphi 0, %s72
      %s87 = sphi 0, %s73
      %s93 = sphi 0, %s95
      %s96 = sphi 0, %s93
      %s97 = sphi 0, %s96
      %s113 = sphi 0, %s97
    $region4: #{tpu_custom_call.1} parent=1 // loop_header_branch
      %18 = sbr.rel (%p16) target = $region8
    $region5: #{tpu_custom_call.1} parent=1 // loop_body
      %s20 = ssub.s32 %s15, 1
      %s21 = ssub.s32 %s15, 2
      %s22 = sadd.s32 %s15, 1
      %s23 = ssub.s32 %s15, %s22
      %p24 = scmp.eq.s32.totalorder %s23, 0
      %s26 = sadd.s32 %s25, 1
      %s27 = scalar_select %p24, %s25, %s26
      %p30 = pneg %p24
      %p31 = scmp.eq.s32.totalorder %s15, 1
      %p32 = por %p30, %p31
      %p33 = scmp.ne.s32.totalorder %s25, %s28
      %p34 = scmp.eq.s32.totalorder %s15, 0
      %p35 = por %p33, %p34
      %p36 = scmp.ne.s32.totalorder %s25, %s28
      %p37 = scmp.eq.s32.totalorder %s20, 1
      %p38 = por %p36, %p37
      %p39 = scmp.ne.s32.totalorder %s28, %s29
      %p40 = scmp.eq.s32.totalorder %s20, 0
      %p41 = por %p39, %p40
      %p42 = scmp.ne.s32.totalorder %s28, %s29
      %p43 = scmp.eq.s32.totalorder %s21, 1
      %p44 = por %p42, %p43
      %p46 = scmp.ne.s32.totalorder %s29, %s45
      %p47 = scmp.eq.s32.totalorder %s21, 0
      %p48 = por %p46, %p47
      %s50 = sadd.s32 %s49, 1
      %p53 = scmp.eq.s32.totalorder %s15, 1
      %p54 = scmp.ne.s32.totalorder %s49, %s51
      %p55 = scmp.eq.s32.totalorder %s15, 0
      %p56 = por %p54, %p55
      %p57 = scmp.ne.s32.totalorder %s49, %s51
      %p58 = scmp.eq.s32.totalorder %s20, 1
      %p59 = por %p57, %p58
      %p60 = scmp.ne.s32.totalorder %s51, %s52
      %p61 = scmp.eq.s32.totalorder %s20, 0
      %p62 = por %p60, %p61
      %p63 = scmp.ne.s32.totalorder %s51, %s52
      %p64 = scmp.eq.s32.totalorder %s21, 1
      %p65 = por %p63, %p64
      %p67 = scmp.ne.s32.totalorder %s52, %s66
      %p68 = scmp.eq.s32.totalorder %s21, 0
      %p69 = por %p67, %p68
      %s71 = sadd.s32 %s70, 1
      %p74 = scmp.eq.s32.totalorder %s15, 1
      %p75 = scmp.ne.s32.totalorder %s70, %s72
      %p76 = scmp.eq.s32.totalorder %s15, 0
      %p77 = por %p75, %p76
      %p78 = scmp.ne.s32.totalorder %s70, %s72
      %p79 = scmp.eq.s32.totalorder %s20, 1
      %p80 = por %p78, %p79
      %p81 = scmp.ne.s32.totalorder %s72, %s73
      %p82 = scmp.eq.s32.totalorder %s20, 0
      %p83 = por %p81, %p82
      %p84 = scmp.ne.s32.totalorder %s72, %s73
      %p85 = scmp.eq.s32.totalorder %s21, 1
      %p86 = por %p84, %p85
      %p88 = scmp.ne.s32.totalorder %s73, %s87
      %p89 = scmp.eq.s32.totalorder %s21, 0
      %p90 = por %p88, %p89
      %s91 = ssub.s32 %s15, %s22
      %p92 = scmp.eq.s32.totalorder %s91, 0
      %s94 = sadd.s32 %s93, 1
      %s95 = scalar_select %p92, %s93, %s94
      %p98 = pneg %p92
      %p99 = scmp.eq.s32.totalorder %s15, 1
      %p100 = por %p98, %p99
      %p101 = scmp.ne.s32.totalorder %s93, %s96
      %p102 = scmp.eq.s32.totalorder %s15, 0
      %p103 = por %p101, %p102
      %p104 = scmp.ne.s32.totalorder %s93, %s96
      %p105 = scmp.eq.s32.totalorder %s20, 1
      %p106 = por %p104, %p105
      %p107 = scmp.ne.s32.totalorder %s96, %s97
      %p108 = scmp.eq.s32.totalorder %s20, 0
      %p109 = por %p107, %p108
      %p110 = scmp.ne.s32.totalorder %s96, %s97
      %p111 = scmp.eq.s32.totalorder %s21, 1
      %p112 = por %p110, %p111
      %p114 = scmp.ne.s32.totalorder %s97, %s113
      %p115 = scmp.eq.s32.totalorder %s21, 0
      %p116 = por %p114, %p115
      %p117 = scmp.le.s32.totalorder 1, %s15
      %p118 = scmp.lt.s32.totalorder %s15, 3
      %p119 = pnand %p117, %p118
      %p120 = pneg %p119
      // Predicated region
      $region9: #{tpu_custom_call.1} parent=5 // pred_check
        _
      $region10: #{tpu_custom_call.1} parent=5 // pred_check_branch
        %122 = sbr.rel (%p119) target = $region12
      $region11: #{tpu_custom_call.1} parent=5 // pred_region
        %s123 = ssub.s32 %s15, 1
        // Predicated region
        $region13: #{tpu_custom_call.1} parent=11 // pred_check
          %p124 = pneg %p62
        $region14: #{tpu_custom_call.1} parent=11 // pred_check_branch
          %126 = sbr.rel (%p124) target = $region16
        $region15: #{tpu_custom_call.1} parent=11 // pred_region
          _
        $region16: #{tpu_custom_call.1} parent=11 // pred_fallthru
          _
        // Predicated region
        $region17: #{tpu_custom_call.1} parent=11 // pred_check
          %p127 = pneg %p83
        $region18: #{tpu_custom_call.1} parent=11 // pred_check_branch
          %129 = sbr.rel (%p127) target = $region20
        $region19: #{tpu_custom_call.1} parent=11 // pred_region
          _
        $region20: #{tpu_custom_call.1} parent=11 // pred_fallthru
          _
      $region12: #{tpu_custom_call.1} parent=5 // pred_fallthru
        _
      %p130 = scmp.lt.s32.totalorder %s15, 2
      // Predicated region
      $region21: #{tpu_custom_call.1} parent=5 // pred_check
        %p131 = pneg %p130
      $region22: #{tpu_custom_call.1} parent=5 // pred_check_branch
        %133 = sbr.rel (%p131) target = $region24
      $region23: #{tpu_custom_call.1} parent=5 // pred_region
        // Predicated region
        $region25: #{tpu_custom_call.1} parent=23 // pred_check
          %p134 = pneg %p35
        $region26: #{tpu_custom_call.1} parent=23 // pred_check_branch
          %136 = sbr.rel (%p134) target = $region28
        $region27: #{tpu_custom_call.1} parent=23 // pred_region
          %s137 = sand.u32 %s25, 1
          %s138 = scalar_lea.sflag [#allocation4], %s137
          %s139 = sand.u32 %s25, 1
          %s140 = smul.addr %s139, 12
          %s141 = scalar_lea.vmem [#allocation3], %s140
          %s143 = ssub.s32 192, 192
          %144 = vsyncadd %s138, %s143
          %s145 = smul.addr %s15, 3
          %s146 = smul.addr %s145, 64
          %s147 = scalar_lea.hbm %s0, %s146
          %s149 = sshll.u32 %s141, 4
          %s150 = int_to_ptr.vmem [resolvable:$true] %s149
          %152 = dma.hbm_to_vmem [thread:$0]  %s147, 192, %s150, %s138
        $region28: #{tpu_custom_call.1} parent=23 // pred_fallthru
          _
      $region24: #{tpu_custom_call.1} parent=5 // pred_fallthru
        _
      %p153 = scmp.le.s32.totalorder 1, %s15
      %p154 = scmp.lt.s32.totalorder %s15, 3
      %p155 = pnand %p153, %p154
      %p156 = pneg %p155
      // Predicated region
      $region29: #{tpu_custom_call.1} parent=5 // pred_check
        _
      $region30: #{tpu_custom_call.1} parent=5 // pred_check_branch
        %158 = sbr.rel (%p155) target = $region32
      $region31: #{tpu_custom_call.1} parent=5 // pred_region
        %s159 = ssub.s32 %s15, 1
        %s160 = sand.u32 %s28, 1
        %s161 = scalar_lea.sflag [#allocation4], %s160
        %s162 = sand.u32 %s28, 1
        %s163 = smul.addr %s162, 12
        %s164 = scalar_lea.vmem [#allocation3], %s163
        // Predicated region
        $region33: #{tpu_custom_call.1} parent=31 // pred_check
          %p165 = pneg %p41
        $region34: #{tpu_custom_call.1} parent=31 // pred_check_branch
          %167 = sbr.rel (%p165) target = $region36
        $region35: #{tpu_custom_call.1} parent=31 // pred_region
          %168 = dma.done %s161, 192
        $region36: #{tpu_custom_call.1} parent=31 // pred_fallthru
          _
        %s169 = sand.u32 %s28, 1
        %s170 = scalar_lea.sflag [#allocation4], %s169
        %s171 = sand.u32 %s28, 1
        %s172 = smul.addr %s171, 12
        %s173 = scalar_lea.vmem [#allocation3], %s172
        %p174 = pneg %p41
        %p175 = pneg %p38
        %p176 = pneg %p62
        %p177 = pneg %p59
        %p178 = pneg %p83
        %p179 = pneg %p80
        %p180 = pneg %p109
        %p181 = pneg %p106
        %s182 = sand.u32 %s96, 1
        %s183 = scalar_lea.sflag [#allocation5], %s182
        %s184 = sand.u32 %s96, 1
        %s185 = smul.addr %s184, 8
        %s186 = scalar_lea.vmem [#allocation6], %s185
        %v187 = vlaneseq
        %v188 = vand.u32 %v187, 127
        %v189 = vadd.s32 %v188, 128
        %v190 = vand.u32 %v188, 15
        %v191 = vand.u32 %v189, 15
        %vm192 = vcmp.ge.s32.totalorder %v190, 4
        %vm193 = vcmp.ge.s32.totalorder %v191, 4
        %vm194 = vcmp.lt.s32.totalorder %v190, 12
        %vm195 = vcmp.lt.s32.totalorder %v191, 12
        %vm196 = vcmp.ge.s32.totalorder %v190, 3
        %vm197 = vcmp.ge.s32.totalorder %v191, 3
        %vm198 = vcmp.lt.s32.totalorder %v190, 13
        %vm199 = vcmp.lt.s32.totalorder %v191, 13
        %vm200 = vcmp.ge.s32.totalorder %v190, 2
        %vm201 = vcmp.ge.s32.totalorder %v191, 2
        %vm202 = vcmp.lt.s32.totalorder %v190, 14
        %vm203 = vcmp.lt.s32.totalorder %v191, 14
        %vm204 = vcmp.ge.s32.totalorder %v190, 1
        %vm205 = vcmp.ge.s32.totalorder %v191, 1
        %vm206 = vcmp.lt.s32.totalorder %v190, 15
        %vm207 = vcmp.lt.s32.totalorder %v191, 15
        %v208 = vld [vmem:[%s164] sm:$0xff]
        %v210 = vcombine.high %v208, %v208
        %211 = vrot.lane.b32.xlu0 %v210, 4
        %v212 = vpop.permute.xlu0 %211
        %214 = vrot.lane.b32.xlu0 %v208, 4
        %v215 = vpop.permute.xlu0 %214
        %vm216 = vcmask 31744
        %v217 = vsel %vm216, %v215, %v212
        %v220 = vsel %vm216, %v212, %v215
        %v221 = vsel %vm192, %v220, 0.0
        %v222 = vsel %vm193, %v217, 0.0
        %v225 = vrot.slane %v221, 4
        %v226 = vrot.slane %v222, 4
        %229 = vst [vmem:[#allocation2 + $0xd0] sm:$0xf0] %v225
        %230 = vst [vmem:[#allocation2 + $0xd8] sm:$0xf0] %v226
        %232 = vst [vmem:[#allocation2 + $0xe0] sm:$0xf] %v208
        %233 = vst [vmem:[#allocation2 + $0xe8] sm:$0xf] %v210
        %234 = vrot.lane.b32.xlu0 %v208, 124
        %v235 = vpop.permute.xlu0 %234
        %236 = vrot.lane.b32.xlu0 %v210, 124
        %v237 = vpop.permute.xlu0 %236
        %vm238 = vcmask 1014784
        %v239 = vsel %vm238, %v235, %v237
        %v243 = vsel %vm238, %v237, %v235
        %v244 = vsel %vm194, %v239, 0.0
        %v245 = vsel %vm195, %v243, 0.0
        %v248 = vrot.slane %v244, 4
        %v249 = vrot.slane %v245, 4
        %252 = vst [vmem:[#allocation2 + $0xe0] sm:$0xf0] %v248
        %253 = vst [vmem:[#allocation2 + $0xe8] sm:$0xf0] %v249
        %v254 = vld [vmem:[%s164] sm:$0xff]
        %v255 = vld [vmem:[%s164 + $0x8] sm:$0xf]
        %257 = vrot.lane.b32.xlu0 %v255, 115
        %v258 = vpop.permute.xlu0 %257
        %v261 = vcombine.high %v254, %v254
        %262 = vrot.lane.b32.xlu0 %v254, 115
        %v263 = vpop.permute.xlu0 %262
        %264 = vrot.lane.b32.xlu0 %v261, 115
        %v265 = vpop.permute.xlu0 %264
        %vm266 = vcmask 941056
        %v267 = vsel %vm266, %v263, %v265
        %v268 = vsel %vm266, %v265, %v258
        %vm271 = vcmask 23552
        %v272 = vsel %vm271, %v258, %v267
        %v273 = vsel %vm196, %v272, 0.0
        %v274 = vsel %vm197, %v268, 0.0
        %275 = vst [vmem:[#allocation2 + $0x90] sm:$0xf] %v273
        %276 = vst [vmem:[#allocation2 + $0x98] sm:$0xf] %v274
        %v277 = vcombine.low %v254, %v254
        %v278 = vcombine.low %v255, %v255
        %279 = vrot.lane.b32.xlu0 %v277, 112
        %v280 = vpop.permute.xlu0 %279
        %281 = vrot.lane.b32.xlu0 %v254, 112
        %v282 = vpop.permute.xlu0 %281
        %283 = vrot.lane.b32.xlu0 %v278, 112
        %v284 = vpop.permute.xlu0 %283
        %vm285 = vcmask 916480
        %v286 = vsel %vm285, %v280, %v282
        %v287 = vsel %vm285, %v282, %v284
        %290 = vst [vmem:[#allocation2 + $0x90] sm:$0xf0] %v286
        %291 = vst [vmem:[#allocation2 + $0x98] sm:$0xf0] %v287
        %292 = vrot.lane.b32.xlu0 %v254, 109
        %v293 = vpop.permute.xlu0 %292
        %294 = vrot.lane.b32.xlu0 %v261, 109
        %v295 = vpop.permute.xlu0 %294
        %296 = vrot.lane.b32.xlu0 %v255, 109
        %v297 = vpop.permute.xlu0 %296
        %vm298 = vcmask 891904
        %v299 = vsel %vm298, %v293, %v295
        %v300 = vsel %vm298, %v295, %v297
        %vm304 = vcmask 1022976
        %v305 = vsel %vm304, %v300, %v293
        %v306 = vsel %vm198, %v299, 0.0
        %v307 = vsel %vm199, %v305, 0.0
        %308 = vst [vmem:[#allocation2 + $0xa0] sm:$0xf] %v306
        %309 = vst [vmem:[#allocation2 + $0xa8] sm:$0xf] %v307
        %v310 = vld [vmem:[%s164] sm:$0xff]
        %v311 = vld [vmem:[%s164 + $0x8] sm:$0xf]
        %313 = vrot.lane.b32.xlu0 %v311, 98
        %v314 = vpop.permute.xlu0 %313
        %v317 = vcombine.high %v310, %v310
        %318 = vrot.lane.b32.xlu0 %v310, 98
        %v319 = vpop.permute.xlu0 %318
        %320 = vrot.lane.b32.xlu0 %v317, 98
        %v321 = vpop.permute.xlu0 %320
        %vm322 = vcmask 801792
        %v323 = vsel %vm322, %v319, %v321
        %v324 = vsel %vm322, %v321, %v314
        %vm327 = vcmask 15360
        %v328 = vsel %vm327, %v314, %v323
        %v329 = vsel %vm200, %v328, 0.0
        %v330 = vsel %vm201, %v324, 0.0
        %v333 = vrot.slane %v329, 4
        %v334 = vrot.slane %v330, 4
        %337 = vst [vmem:[#allocation2 + $0x40] sm:$0xf0] %v333
        %338 = vst [vmem:[#allocation2 + $0x48] sm:$0xf0] %v334
        %339 = vrot.lane.b32.xlu0 %v310, 96
        %v340 = vpop.permute.xlu0 %339
        %341 = vrot.lane.b32.xlu0 %v317, 96
        %v342 = vpop.permute.xlu0 %341
        %343 = vrot.lane.b32.xlu0 %v311, 96
        %v344 = vpop.permute.xlu0 %343
        %vm345 = vcmask 785408
        %v346 = vsel %vm345, %v340, %v342
        %v347 = vsel %vm345, %v342, %v344
        %350 = vst [vmem:[#allocation2 + $0x50] sm:$0xf] %v346
        %351 = vst [vmem:[#allocation2 + $0x58] sm:$0xf] %v347
        %352 = vrot.lane.b32.xlu0 %v310, 94
        %v353 = vpop.permute.xlu0 %352
        %354 = vrot.lane.b32.xlu0 %v317, 94
        %v355 = vpop.permute.xlu0 %354
        %356 = vrot.lane.b32.xlu0 %v311, 94
        %v357 = vpop.permute.xlu0 %356
        %vm358 = vcmask 769024
        %v359 = vsel %vm358, %v353, %v355
        %v360 = vsel %vm358, %v355, %v357
        %vm364 = vcmask 1031168
        %v365 = vsel %vm364, %v360, %v353
        %v366 = vsel %vm202, %v359, 0.0
        %v367 = vsel %vm203, %v365, 0.0
        %v370 = vrot.slane %v366, 4
        %v371 = vrot.slane %v367, 4
        %374 = vst [vmem:[#allocation2 + $0x50] sm:$0xf0] %v370
        %375 = vst [vmem:[#allocation2 + $0x58] sm:$0xf0] %v371
        %v376 = vld [vmem:[%s164] sm:$0xff]
        %v377 = vld [vmem:[%s164 + $0x8] sm:$0xf]
        %379 = vrot.lane.b32.xlu0 %v377, 81
        %v380 = vpop.permute.xlu0 %379
        %v383 = vcombine.high %v376, %v376
        %384 = vrot.lane.b32.xlu0 %v376, 81
        %v385 = vpop.permute.xlu0 %384
        %386 = vrot.lane.b32.xlu0 %v383, 81
        %v387 = vpop.permute.xlu0 %386
        %vm388 = vcmask 662528
        %v389 = vsel %vm388, %v385, %v387
        %v390 = vsel %vm388, %v387, %v380
        %vm393 = vcmask 7168
        %v394 = vsel %vm393, %v380, %v389
        %v395 = vsel %vm204, %v394, 0.0
        %v396 = vsel %vm205, %v390, 0.0
        %397 = vst [vmem:[#allocation2] sm:$0xf] %v395
        %398 = vst [vmem:[#allocation2 + $0x8] sm:$0xf] %v396
        %v399 = vcombine.low %v376, %v376
        %v400 = vcombine.low %v377, %v377
        %401 = vrot.lane.b32.xlu0 %v399, 80
        %v402 = vpop.permute.xlu0 %401
        %403 = vrot.lane.b32.xlu0 %v376, 80
        %v404 = vpop.permute.xlu0 %403
        %405 = vrot.lane.b32.xlu0 %v400, 80
        %v406 = vpop.permute.xlu0 %405
        %vm407 = vcmask 654336
        %v408 = vsel %vm407, %v402, %v404
        %v409 = vsel %vm407, %v404, %v406
        %412 = vst [vmem:[#allocation2] sm:$0xf0] %v408
        %413 = vst [vmem:[#allocation2 + $0x8] sm:$0xf0] %v409
        %414 = vrot.lane.b32.xlu0 %v376, 79
        %v415 = vpop.permute.xlu0 %414
        %416 = vrot.lane.b32.xlu0 %v383, 79
        %v417 = vpop.permute.xlu0 %416
        %418 = vrot.lane.b32.xlu0 %v377, 79
        %v419 = vpop.permute.xlu0 %418
        %vm420 = vcmask 646144
        %v421 = vsel %vm420, %v415, %v417
        %v422 = vsel %vm420, %v417, %v419
        %vm426 = vcmask 1039360
        %v427 = vsel %vm426, %v422, %v415
        %v428 = vsel %vm206, %v421, 0.0
        %v429 = vsel %vm207, %v427, 0.0
        %430 = vst [vmem:[#allocation2 + $0x10] sm:$0xf] %v428
        %431 = vst [vmem:[#allocation2 + $0x18] sm:$0xf] %v429
        %v432 = vld [vmem:[%s164] sm:$0xff]
        %v433 = vld [vmem:[%s164 + $0x8] sm:$0xf]
        %435 = vrot.lane.b32.xlu0 %v433, 65
        %v436 = vpop.permute.xlu0 %435
        %v439 = vcombine.high %v432, %v432
        %440 = vrot.lane.b32.xlu0 %v432, 65
        %v441 = vpop.permute.xlu0 %440
        %442 = vrot.lane.b32.xlu0 %v439, 65
        %v443 = vpop.permute.xlu0 %442
        %vm444 = vcmask 531456
        %v445 = vsel %vm444, %v441, %v443
        %v446 = vsel %vm444, %v443, %v436
        %v449 = vsel %vm393, %v436, %v445
        %v450 = vsel %vm204, %v449, 0.0
        %v451 = vsel %vm205, %v446, 0.0
        %v454 = vrot.slane %v450, 4
        %v455 = vrot.slane %v451, 4
        %458 = vst [vmem:[#allocation2 + $0x10] sm:$0xf0] %v454
        %459 = vst [vmem:[#allocation2 + $0x18] sm:$0xf0] %v455
        %460 = vrot.lane.b32.xlu0 %v432, 64
        %v461 = vpop.permute.xlu0 %460
        %462 = vrot.lane.b32.xlu0 %v439, 64
        %v463 = vpop.permute.xlu0 %462
        %464 = vrot.lane.b32.xlu0 %v433, 64
        %v465 = vpop.permute.xlu0 %464
        %vm466 = vcmask 523264
        %v467 = vsel %vm466, %v461, %v463
        %v468 = vsel %vm466, %v463, %v465
        %471 = vst [vmem:[#allocation2 + $0x20] sm:$0xf] %v467
        %472 = vst [vmem:[#allocation2 + $0x28] sm:$0xf] %v468
        %473 = vrot.lane.b32.xlu0 %v432, 63
        %v474 = vpop.permute.xlu0 %473
        %475 = vrot.lane.b32.xlu0 %v439, 63
        %v476 = vpop.permute.xlu0 %475
        %477 = vrot.lane.b32.xlu0 %v433, 63
        %v478 = vpop.permute.xlu0 %477
        %vm479 = vcmask 515072
        %v480 = vsel %vm479, %v474, %v476
        %v481 = vsel %vm479, %v476, %v478
        %v485 = vsel %vm426, %v481, %v474
        %v486 = vsel %vm206, %v480, 0.0
        %v487 = vsel %vm207, %v485, 0.0
        %v490 = vrot.slane %v486, 4
        %v491 = vrot.slane %v487, 4
        %494 = vst [vmem:[#allocation2 + $0x20] sm:$0xf0] %v490
        %495 = vst [vmem:[#allocation2 + $0x28] sm:$0xf0] %v491
        %496 = vrot.lane.b32.xlu0 %v433, 66
        %v497 = vpop.permute.xlu0 %496
        %499 = vrot.lane.b32.xlu0 %v432, 66
        %v500 = vpop.permute.xlu0 %499
        %501 = vrot.lane.b32.xlu0 %v439, 66
        %v502 = vpop.permute.xlu0 %501
        %vm503 = vcmask 539648
        %v504 = vsel %vm503, %v500, %v502
        %v505 = vsel %vm503, %v502, %v497
        %v508 = vsel %vm327, %v497, %v504
        %v509 = vsel %vm200, %v508, 0.0
        %v510 = vsel %vm201, %v505, 0.0
        %511 = vst [vmem:[#allocation2 + $0x60] sm:$0xf] %v509
        %512 = vst [vmem:[#allocation2 + $0x68] sm:$0xf] %v510
        %v513 = vcombine.low %v432, %v432
        %v514 = vcombine.low %v433, %v433
        %515 = vrot.lane.b32.xlu0 %v513, 64
        %v516 = vpop.permute.xlu0 %515
        %517 = vrot.lane.b32.xlu0 %v514, 64
        %v518 = vpop.permute.xlu0 %517
        %v519 = vsel %vm466, %v516, %v461
        %v520 = vsel %vm466, %v461, %v518
        %523 = vst [vmem:[#allocation2 + $0x60] sm:$0xf0] %v519
        %524 = vst [vmem:[#allocation2 + $0x68] sm:$0xf0] %v520
        %525 = vrot.lane.b32.xlu0 %v432, 62
        %v526 = vpop.permute.xlu0 %525
        %527 = vrot.lane.b32.xlu0 %v439, 62
        %v528 = vpop.permute.xlu0 %527
        %529 = vrot.lane.b32.xlu0 %v433, 62
        %v530 = vpop.permute.xlu0 %529
        %vm531 = vcmask 506880
        %v532 = vsel %vm531, %v526, %v528
        %v533 = vsel %vm531, %v528, %v530
        %v537 = vsel %vm364, %v533, %v526
        %v538 = vsel %vm202, %v532, 0.0
        %v539 = vsel %vm203, %v537, 0.0
        %540 = vst [vmem:[#allocation2 + $0x70] sm:$0xf] %v538
        %541 = vst [vmem:[#allocation2 + $0x78] sm:$0xf] %v539
        %542 = vrot.lane.b32.xlu0 %v433, 67
        %v543 = vpop.permute.xlu0 %542
        %545 = vrot.lane.b32.xlu0 %v432, 67
        %v546 = vpop.permute.xlu0 %545
        %547 = vrot.lane.b32.xlu0 %v439, 67
        %v548 = vpop.permute.xlu0 %547
        %vm549 = vcmask 547840
        %v550 = vsel %vm549, %v546, %v548
        %v551 = vsel %vm549, %v548, %v543
        %v554 = vsel %vm271, %v543, %v550
        %v555 = vsel %vm196, %v554, 0.0
        %v556 = vsel %vm197, %v551, 0.0
        %v559 = vrot.slane %v555, 4
        %v560 = vrot.slane %v556, 4
        %563 = vst [vmem:[#allocation2 + $0xa0] sm:$0xf0] %v559
        %564 = vst [vmem:[#allocation2 + $0xa8] sm:$0xf0] %v560
        %565 = vst [vmem:[#allocation2 + $0xb0] sm:$0xf] %v467
        %566 = vst [vmem:[#allocation2 + $0xb8] sm:$0xf] %v468
        %567 = vrot.lane.b32.xlu0 %v432, 61
        %v568 = vpop.permute.xlu0 %567
        %569 = vrot.lane.b32.xlu0 %v439, 61
        %v570 = vpop.permute.xlu0 %569
        %571 = vrot.lane.b32.xlu0 %v433, 61
        %v572 = vpop.permute.xlu0 %571
        %vm573 = vcmask 498688
        %v574 = vsel %vm573, %v568, %v570
        %v575 = vsel %vm573, %v570, %v572
        %v579 = vsel %vm304, %v575, %v568
        %v580 = vsel %vm198, %v574, 0.0
        %v581 = vsel %vm199, %v579, 0.0
        %v584 = vrot.slane %v580, 4
        %v585 = vrot.slane %v581, 4
        %588 = vst [vmem:[#allocation2 + $0xb0] sm:$0xf0] %v584
        %589 = vst [vmem:[#allocation2 + $0xb8] sm:$0xf0] %v585
        %590 = vrot.lane.b32.xlu0 %v433, 68
        %v591 = vpop.permute.xlu0 %590
        %593 = vrot.lane.b32.xlu0 %v432, 68
        %v594 = vpop.permute.xlu0 %593
        %595 = vrot.lane.b32.xlu0 %v439, 68
        %v596 = vpop.permute.xlu0 %595
        %vm597 = vcmask 556032
        %v598 = vsel %vm597, %v594, %v596
        %v599 = vsel %vm597, %v596, %v591
        %v602 = vsel %vm216, %v591, %v598
        %v603 = vsel %vm192, %v602, 0.0
        %v604 = vsel %vm193, %v599, 0.0
        %605 = vst [vmem:[#allocation2 + $0xf0] sm:$0xf] %v603
        %606 = vst [vmem:[#allocation2 + $0xf8] sm:$0xf] %v604
        %607 = vst [vmem:[#allocation2 + $0xf0] sm:$0xf0] %v519
        %608 = vst [vmem:[#allocation2 + $0xf8] sm:$0xf0] %v520
        %609 = vrot.lane.b32.xlu0 %v432, 60
        %v610 = vpop.permute.xlu0 %609
        %611 = vrot.lane.b32.xlu0 %v439, 60
        %v612 = vpop.permute.xlu0 %611
        %613 = vrot.lane.b32.xlu0 %v433, 60
        %v614 = vpop.permute.xlu0 %613
        %vm615 = vcmask 490496
        %v616 = vsel %vm615, %v610, %v612
        %v617 = vsel %vm615, %v612, %v614
        %v621 = vsel %vm238, %v617, %v610
        %v622 = vsel %vm194, %v616, 0.0
        %v623 = vsel %vm195, %v621, 0.0
        %624 = vst [vmem:[#allocation2 + $0x100] sm:$0xf] %v622
        %625 = vst [vmem:[#allocation2 + $0x108] sm:$0xf] %v623
        %v626 = vld [vmem:[%s164] sm:$0xff]
        %v627 = vld [vmem:[%s164 + $0x8] sm:$0xf]
        %629 = vrot.lane.b32.xlu0 %v627, 49
        %v630 = vpop.permute.xlu0 %629
        %v633 = vcombine.high %v626, %v626
        %634 = vrot.lane.b32.xlu0 %v626, 49
        %v635 = vpop.permute.xlu0 %634
        %636 = vrot.lane.b32.xlu0 %v633, 49
        %v637 = vpop.permute.xlu0 %636
        %vm638 = vcmask 400384
        %v639 = vsel %vm638, %v635, %v637
        %v640 = vsel %vm638, %v637, %v630
        %v643 = vsel %vm393, %v630, %v639
        %v644 = vsel %vm204, %v643, 0.0
        %v645 = vsel %vm205, %v640, 0.0
        %646 = vst [vmem:[#allocation2 + $0x30] sm:$0xf] %v644
        %647 = vst [vmem:[#allocation2 + $0x38] sm:$0xf] %v645
        %v648 = vcombine.low %v626, %v626
        %v649 = vcombine.low %v627, %v627
        %650 = vrot.lane.b32.xlu0 %v648, 48
        %v651 = vpop.permute.xlu0 %650
        %652 = vrot.lane.b32.xlu0 %v626, 48
        %v653 = vpop.permute.xlu0 %652
        %654 = vrot.lane.b32.xlu0 %v649, 48
        %v655 = vpop.permute.xlu0 %654
        %vm656 = vcmask 392192
        %v657 = vsel %vm656, %v651, %v653
        %v658 = vsel %vm656, %v653, %v655
        %661 = vst [vmem:[#allocation2 + $0x30] sm:$0xf0] %v657
        %662 = vst [vmem:[#allocation2 + $0x38] sm:$0xf0] %v658
        %663 = vrot.lane.b32.xlu0 %v626, 47
        %v664 = vpop.permute.xlu0 %663
        %665 = vrot.lane.b32.xlu0 %v633, 47
        %v666 = vpop.permute.xlu0 %665
        %667 = vrot.lane.b32.xlu0 %v627, 47
        %v668 = vpop.permute.xlu0 %667
        %vm669 = vcmask 384000
        %v670 = vsel %vm669, %v664, %v666
        %v671 = vsel %vm669, %v666, %v668
        %v675 = vsel %vm426, %v671, %v664
        %v676 = vsel %vm206, %v670, 0.0
        %v677 = vsel %vm207, %v675, 0.0
        %678 = vst [vmem:[#allocation2 + $0x40] sm:$0xf] %v676
        %679 = vst [vmem:[#allocation2 + $0x48] sm:$0xf] %v677
        %v680 = vld [vmem:[%s164] sm:$0xff]
        %v681 = vld [vmem:[%s164 + $0x8] sm:$0xf]
        %683 = vrot.lane.b32.xlu0 %v681, 34
        %v684 = vpop.permute.xlu0 %683
        %v687 = vcombine.high %v680, %v680
        %688 = vrot.lane.b32.xlu0 %v680, 34
        %v689 = vpop.permute.xlu0 %688
        %690 = vrot.lane.b32.xlu0 %v687, 34
        %v691 = vpop.permute.xlu0 %690
        %vm692 = vcmask 277504
        %v693 = vsel %vm692, %v689, %v691
        %v694 = vsel %vm692, %v691, %v684
        %v697 = vsel %vm327, %v684, %v693
        %v698 = vsel %vm200, %v697, 0.0
        %v699 = vsel %vm201, %v694, 0.0
        %v702 = vrot.slane %v698, 4
        %v703 = vrot.slane %v699, 4
        %706 = vst [vmem:[#allocation2 + $0x70] sm:$0xf0] %v702
        %707 = vst [vmem:[#allocation2 + $0x78] sm:$0xf0] %v703
        %708 = vrot.lane.b32.xlu0 %v680, 32
        %v709 = vpop.permute.xlu0 %708
        %710 = vrot.lane.b32.xlu0 %v687, 32
        %v711 = vpop.permute.xlu0 %710
        %712 = vrot.lane.b32.xlu0 %v681, 32
        %v713 = vpop.permute.xlu0 %712
        %vm714 = vcmask 261120
        %v715 = vsel %vm714, %v709, %v711
        %v716 = vsel %vm714, %v711, %v713
        %719 = vst [vmem:[#allocation2 + $0x80] sm:$0xf] %v715
        %720 = vst [vmem:[#allocation2 + $0x88] sm:$0xf] %v716
        %721 = vrot.lane.b32.xlu0 %v680, 30
        %v722 = vpop.permute.xlu0 %721
        %723 = vrot.lane.b32.xlu0 %v687, 30
        %v724 = vpop.permute.xlu0 %723
        %725 = vrot.lane.b32.xlu0 %v681, 30
        %v726 = vpop.permute.xlu0 %725
        %vm727 = vcmask 244736
        %v728 = vsel %vm727, %v722, %v724
        %v729 = vsel %vm727, %v724, %v726
        %v733 = vsel %vm364, %v729, %v722
        %v734 = vsel %vm202, %v728, 0.0
        %v735 = vsel %vm203, %v733, 0.0
        %v738 = vrot.slane %v734, 4
        %v739 = vrot.slane %v735, 4
        %742 = vst [vmem:[#allocation2 + $0x80] sm:$0xf0] %v738
        %743 = vst [vmem:[#allocation2 + $0x88] sm:$0xf0] %v739
        %v744 = vld [vmem:[%s164] sm:$0xff]
        %v745 = vld [vmem:[%s164 + $0x8] sm:$0xf]
        %747 = vrot.lane.b32.xlu0 %v745, 19
        %v748 = vpop.permute.xlu0 %747
        %v751 = vcombine.high %v744, %v744
        %752 = vrot.lane.b32.xlu0 %v744, 19
        %v753 = vpop.permute.xlu0 %752
        %754 = vrot.lane.b32.xlu0 %v751, 19
        %v755 = vpop.permute.xlu0 %754
        %vm756 = vcmask 154624
        %v757 = vsel %vm756, %v753, %v755
        %v758 = vsel %vm756, %v755, %v748
        %v761 = vsel %vm271, %v748, %v757
        %v762 = vsel %vm196, %v761, 0.0
        %v763 = vsel %vm197, %v758, 0.0
        %764 = vst [vmem:[#allocation2 + $0xc0] sm:$0xf] %v762
        %765 = vst [vmem:[#allocation2 + $0xc8] sm:$0xf] %v763
        %v766 = vcombine.low %v744, %v744
        %v767 = vcombine.low %v745, %v745
        %768 = vrot.lane.b32.xlu0 %v766, 16
        %v769 = vpop.permute.xlu0 %768
        %770 = vrot.lane.b32.xlu0 %v744, 16
        %v771 = vpop.permute.xlu0 %770
        %772 = vrot.lane.b32.xlu0 %v767, 16
        %v773 = vpop.permute.xlu0 %772
        %vm774 = vcmask 130048
        %v775 = vsel %vm774, %v769, %v771
        %v776 = vsel %vm774, %v771, %v773
        %779 = vst [vmem:[#allocation2 + $0xc0] sm:$0xf0] %v775
        %780 = vst [vmem:[#allocation2 + $0xc8] sm:$0xf0] %v776
        %781 = vrot.lane.b32.xlu0 %v744, 13
        %v782 = vpop.permute.xlu0 %781
        %783 = vrot.lane.b32.xlu0 %v751, 13
        %v784 = vpop.permute.xlu0 %783
        %785 = vrot.lane.b32.xlu0 %v745, 13
        %v786 = vpop.permute.xlu0 %785
        %vm787 = vcmask 105472
        %v788 = vsel %vm787, %v782, %v784
        %v789 = vsel %vm787, %v784, %v786
        %v793 = vsel %vm304, %v789, %v782
        %v794 = vsel %vm198, %v788, 0.0
        %v795 = vsel %vm199, %v793, 0.0
        %796 = vst [vmem:[#allocation2 + $0xd0] sm:$0xf] %v794
        %797 = vst [vmem:[#allocation2 + $0xd8] sm:$0xf] %v795
        %v798 = vld [vmem:[%s164 + $0x4] sm:$0xff]
        %v800 = vcombine.high %v798, %v798
        %801 = vrot.lane.b32.xlu0 %v800, 4
        %v802 = vpop.permute.xlu0 %801
        %804 = vrot.lane.b32.xlu0 %v798, 4
        %v805 = vpop.permute.xlu0 %804
        %v806 = vsel %vm216, %v805, %v802
        %v809 = vsel %vm216, %v802, %v805
        %v810 = vsel %vm192, %v809, 0.0
        %v811 = vsel %vm193, %v806, 0.0
        %v814 = vrot.slane %v810, 4
        %v815 = vrot.slane %v811, 4
        %818 = vst [vmem:[#allocation2 + $0x100] sm:$0xf0] %v814
        %819 = vst [vmem:[#allocation2 + $0x108] sm:$0xf0] %v815
        %821 = vst [vmem:[#allocation2 + $0x110] sm:$0xf] %v798
        %822 = vst [vmem:[#allocation2 + $0x118] sm:$0xf] %v800
        %823 = vrot.lane.b32.xlu0 %v798, 124
        %v824 = vpop.permute.xlu0 %823
        %825 = vrot.lane.b32.xlu0 %v800, 124
        %v826 = vpop.permute.xlu0 %825
        %v827 = vsel %vm238, %v824, %v826
        %v831 = vsel %vm238, %v826, %v824
        %v832 = vsel %vm194, %v827, 0.0
        %v833 = vsel %vm195, %v831, 0.0
        %v836 = vrot.slane %v832, 4
        %v837 = vrot.slane %v833, 4
        %840 = vst [vmem:[#allocation2 + $0x110] sm:$0xf0] %v836
        %841 = vst [vmem:[#allocation2 + $0x118] sm:$0xf0] %v837
        %v842 = vld [vmem:[%s1] sm:$0xff]
        %v843 = vld [vmem:[#allocation2] sm:$0xff]
        %v844 = vld [vmem:[#allocation2 + $0x8] sm:$0xff]
        %v845 = vld [vmem:[#allocation2 + $0x10] sm:$0xff]
        %v846 = vld [vmem:[#allocation2 + $0x18] sm:$0xff]
        %v847 = vld [vmem:[#allocation2 + $0x20] sm:$0xff]
        %v848 = vld [vmem:[#allocation2 + $0x28] sm:$0xff]
        %v849 = vld [vmem:[#allocation2 + $0x30] sm:$0xff]
        %v850 = vld [vmem:[#allocation2 + $0x38] sm:$0xff]
        %v851 = vld [vmem:[#allocation2 + $0x40] sm:$0xff]
        %v852 = vld [vmem:[#allocation2 + $0x48] sm:$0xff]
        %v853 = vld [vmem:[#allocation2 + $0x50] sm:$0xff]
        %v854 = vld [vmem:[#allocation2 + $0x58] sm:$0xff]
        %v855 = vld [vmem:[#allocation2 + $0x60] sm:$0xff]
        %v856 = vld [vmem:[#allocation2 + $0x68] sm:$0xff]
        %v857 = vld [vmem:[#allocation2 + $0x70] sm:$0xff]
        %v858 = vld [vmem:[#allocation2 + $0x78] sm:$0xff]
        %v859 = vld [vmem:[#allocation2 + $0x80] sm:$0xff]
        %v860 = vld [vmem:[#allocation2 + $0x88] sm:$0xff]
        %v861 = vld [vmem:[#allocation2 + $0x90] sm:$0xff]
        %v862 = vld [vmem:[#allocation2 + $0x98] sm:$0xff]
        %v863 = vld [vmem:[#allocation2 + $0xa0] sm:$0xff]
        %v864 = vld [vmem:[#allocation2 + $0xa8] sm:$0xff]
        %v865 = vld [vmem:[#allocation2 + $0xb0] sm:$0xff]
        %v866 = vld [vmem:[#allocation2 + $0xb8] sm:$0xff]
        %v867 = vld [vmem:[#allocation2 + $0xc0] sm:$0xff]
        %v868 = vld [vmem:[#allocation2 + $0xc8] sm:$0xff]
        %v869 = vld [vmem:[#allocation2 + $0xd0] sm:$0xff]
        %v870 = vld [vmem:[#allocation2 + $0xd8] sm:$0xff]
        %v871 = vld [vmem:[#allocation2 + $0xe0] sm:$0xff]
        %v872 = vld [vmem:[#allocation2 + $0xe8] sm:$0xff]
        %v873 = vld [vmem:[#allocation2 + $0xf0] sm:$0xff]
        %v874 = vld [vmem:[#allocation2 + $0xf8] sm:$0xff]
        %v875 = vld [vmem:[#allocation2 + $0x100] sm:$0xff]
        %v876 = vld [vmem:[#allocation2 + $0x108] sm:$0xff]
        %v877 = vld [vmem:[#allocation2 + $0x110] sm:$0xff]
        %v878 = vld [vmem:[#allocation2 + $0x118] sm:$0xff]
        %v879 = vld [vmem:[%s2] sm:$0xf]
        %881 = vset.pattern.permute.xlu0 0
        %882 = vperm.xlu0 %881, %v879
        %v883 = vpop.permute.xlu0 %882
        %v886 = vcombine.high %v842, %v842
        %v887 = vsel %vm774, %v886, 0
        %889 = vmatprep.subr.mxu0 %v844
        %890 = vmatpush1.msra.mxu0 %v843
        %891 = vmatprep.subr.mxu0 %v846
        %892 = vmatpush1.msra.mxu0 %v845
        %893 = vmatprep.subr.mxu0 %v848
        %894 = vmatpush1.msra.mxu0 %v847
        %895 = vmatprep.subr.mxu0 %v850
        %896 = vmatpush1.msra.mxu0 %v849
        %897 = vmatprep.subr.mxu0 %v852
        %898 = vmatpush1.msra.mxu0 %v851
        %899 = vmatprep.subr.mxu0 %v854
        %900 = vmatpush1.msra.mxu0 %v853
        %901 = vmatprep.subr.mxu0 %v856
        %902 = vmatpush1.msra.mxu0 %v855
        %903 = vmatprep.subr.mxu0 %v858
        %904 = vmatpush1.msra.mxu0 %v857
        %905 = vmatprep.subr.mxu0 %v860
        %906 = vmatpush1.msra.mxu0 %v859
        %907 = vmatprep.subr.mxu0 %v862
        %908 = vmatpush1.msra.mxu0 %v861
        %909 = vmatprep.subr.mxu0 %v864
        %910 = vmatpush1.msra.mxu0 %v863
        %911 = vmatprep.subr.mxu0 %v866
        %912 = vmatpush1.msra.mxu0 %v865
        %913 = vmatprep.subr.mxu0 %v868
        %914 = vmatpush1.msra.mxu0 %v867
        %915 = vmatprep.subr.mxu0 %v870
        %916 = vmatpush1.msra.mxu0 %v869
        %917 = vmatprep.subr.mxu0 %v872
        %918 = vmatpush1.msra.mxu0 %v871
        %919 = vmatprep.subr.mxu0 %v874
        %920 = vmatpush1.msra.mxu0 %v873
        %921 = vmatprep.subr.mxu0 %v876
        %922 = vmatpush1.msra.mxu0 %v875
        %923 = vmatprep.subr.mxu0 %v878
        %924 = vmatpush1.msra.mxu0 %v877
        %925 = vmatprep.subr.mxu0 0.0
        %926 = vmatpush1.msra.mxu0 0.0
        %927 = vmatprep.subr.mxu0 0.0
        %928 = vmatpush1.msra.mxu0 0.0
        %929 = vmatprep.subr.mxu0 0.0
        %930 = vmatpush1.msra.mxu0 0.0
        %931 = vmatprep.subr.mxu0 0.0
        %932 = vmatpush1.msra.mxu0 0.0
        %933 = vmatprep.subr.mxu0 0.0
        %934 = vmatpush1.msra.mxu0 0.0
        %935 = vmatprep.subr.mxu0 0.0
        %936 = vmatpush1.msra.mxu0 0.0
        %937 = vmatprep.subr.mxu0 0.0
        %938 = vmatpush1.msra.mxu0 0.0
        %939 = vmatprep.subr.mxu0 0.0
        %940 = vmatpush1.msra.mxu0 0.0
        %941 = vmatprep.subr.mxu0 0.0
        %942 = vmatpush1.msra.mxu0 0.0
        %943 = vmatprep.subr.mxu0 0.0
        %944 = vmatpush1.msra.mxu0 0.0
        %945 = vmatprep.subr.mxu0 0.0
        %946 = vmatpush1.msra.mxu0 0.0
        %947 = vmatprep.subr.mxu0 0.0
        %948 = vmatpush1.msra.mxu0 0.0
        %949 = vmatprep.subr.mxu0 0.0
        %950 = vmatpush1.msra.mxu0 0.0
        %951 = vmatprep.subr.mxu0 0.0
        %952 = vmatpush1.msra.mxu0 0.0
        %953 = vmatprep.mubr.f32.mxu0 %v887
        %954 = vmatmul.mubr.f32.gmra.mrb[0].mxu0 %v842
        %v955 = vpop.f32.mrb[0].mxu0
        %v956 = vadd.f32 %v883, %v955
        %v957 = vpop.f32.mrb[0].mxu0
        %v958 = vadd.f32 %v883, %v957
        %959 = vdwg.mxu0
        %v962 = vcombine.low %v956, %v958
        %964 = vst [vmem:[%s186] sm:$0xff] %v962
        %s965 = sand.u32 %s96, 1
        %s966 = scalar_lea.sflag [#allocation5], %s965
        %s967 = sand.u32 %s96, 1
        %s968 = smul.addr %s967, 8
        %s969 = scalar_lea.vmem [#allocation6], %s968
        // Predicated region
        $region37: #{tpu_custom_call.1} parent=31 // pred_check
          %p970 = pneg %p106
        $region38: #{tpu_custom_call.1} parent=31 // pred_check_branch
          %972 = sbr.rel (%p970) target = $region40
        $region39: #{tpu_custom_call.1} parent=31 // pred_region
          %s974 = ssub.s32 128, 128
          %975 = vsyncadd %s966, %s974
          %s976 = smul.addr %s20, 2
          %s977 = smul.addr %s976, 64
          %s978 = scalar_lea.hbm %s3, %s977
          %s980 = sshll.u32 %s969, 4
          %s981 = int_to_ptr.vmem [resolvable:$true] %s980
          %983 = dma.vmem_to_hbm [thread:$0]  %s981, 128, %s978, %s966
        $region40: #{tpu_custom_call.1} parent=31 // pred_fallthru
          _
      $region32: #{tpu_custom_call.1} parent=5 // pred_fallthru
        _
      %p984 = scmp.le.s32.totalorder 2, %s15
      // Predicated region
      $region41: #{tpu_custom_call.1} parent=5 // pred_check
        %p985 = pneg %p984
      $region42: #{tpu_custom_call.1} parent=5 // pred_check_branch
        %987 = sbr.rel (%p985) target = $region44
      $region43: #{tpu_custom_call.1} parent=5 // pred_region
        %s988 = ssub.s32 %s15, 2
        // Predicated region
        $region45: #{tpu_custom_call.1} parent=43 // pred_check
          %p989 = pneg %p112
        $region46: #{tpu_custom_call.1} parent=43 // pred_check_branch
          %991 = sbr.rel (%p989) target = $region48
        $region47: #{tpu_custom_call.1} parent=43 // pred_region
          %s992 = sand.u32 %s97, 1
          %s993 = scalar_lea.sflag [#allocation5], %s992
          %s994 = sand.u32 %s97, 1
          %s995 = smul.addr %s994, 8
          %s996 = scalar_lea.vmem [#allocation6], %s995
          %997 = dma.done %s993, 128
        $region48: #{tpu_custom_call.1} parent=43 // pred_fallthru
          _
      $region44: #{tpu_custom_call.1} parent=5 // pred_fallthru
        _
    $region6: #{tpu_custom_call.1} parent=1 // loop_footer
      %s19 = sadd.s32 1, %s15
    $region7: #{tpu_custom_call.1} parent=1 // loop_footer_branch
      %14 = sbr.rel target = $region3
    $region8: #{tpu_custom_call.1} parent=1 // loop_exit
      _
    %998 = vsyncpa [#allocation4], 1
    %s999 = scalar_lea.sflag [#allocation4], 1
    %1000 = vsyncpa %s999, 1
    %1001 = vsyncpa [#allocation5], 1
    %s1002 = scalar_lea.sflag [#allocation5], 1
    %1003 = vsyncpa %s1002, 1

</llo_original>
